<compile_context>
chip_gen: v7x
topology: tpu7x:2x2x1
jax: 0.10.0
libtpu: 0.0.40
codegen_flags: <defaults>
</compile_context>

<pallas_src>
import functools
import math

import jax
import jax.numpy as jnp
from jax import lax
from jax.experimental import pallas as pl
from jax.experimental.pallas import tpu as pltpu

EPS = 1e-5          # nn.BatchNorm1d default eps
LEAKY_SLOPE = 0.01  # nn.LeakyReLU default negative_slope


# ---------------------------------------------------------------------------
# Mask construction (mirrors PatchMaskedLinear._create_mask_and_degrees with
# is_output=False, random_mask=False).  Pure glue — runs once in plain JAX.
# ---------------------------------------------------------------------------
def _hidden_mask_and_degrees(in_degrees, out_patchs, ar_patchs, patch_size):
    in_patchs = int(in_degrees.shape[0])
    _max = max(1, ar_patchs - 1)
    _min = min(1, ar_patchs - 1)
    out_degrees = jnp.arange(out_patchs, dtype=jnp.int32) % _max + _min
    pmask = (out_degrees[:, None] >= in_degrees[None, :]).astype(jnp.float32)   # (O, I)
    mask = jnp.tile(pmask[:, :, None, None], (1, 1, patch_size, patch_size))    # (O, I, p, p)
    mask = jnp.transpose(mask, (0, 2, 1, 3)).reshape(out_patchs * patch_size,
                                                     in_patchs * patch_size)
    return mask, out_degrees


# ---------------------------------------------------------------------------
# One-time parameter preparation: fold masks + eval-mode BN into weights/bias,
# pre-transpose to [in, out], fold the two first-layer biases together.
# ---------------------------------------------------------------------------
def fold_params(w0, m0, b0, w1, m1, b1, wc, bc, bn0, bnc, bn1,
                *, compute_dtype=jnp.bfloat16):
    def fold(w_masked, b, bn):
        g, beta, mu, va = bn
        s = g * lax.rsqrt(va + EPS)                       # (F,) per-output scale
        w_f = (w_masked * s[:, None]).T                   # (in, out), BN scale folded
        b_f = (b - mu) * s + beta                         # fused bias
        return w_f.astype(compute_dtype), b_f.astype(jnp.float32)

    w0f, b0f = fold(w0 * m0, b0, bn0)                     # masked linear 0 + BN0
    w1f, b1f = fold(w1 * m1, b1, bn1)                     # masked linear 1 + BN1
    wcf, bcf = fold(wc, bc, bnc)                          # context linear + BNc

    F = b0f.shape[0]
    # Row 0: combined first-layer bias (b0f + bcf); row 1: second-layer bias.
    bias_pack = (jnp.zeros((8, F), jnp.float32)
                 .at[0].set(b0f + bcf).at[1].set(b1f))
    return w0f, wcf, w1f, bias_pack


# ---------------------------------------------------------------------------
# Pallas kernel: per batch-tile forward.  Weights/bias tiles are VMEM-resident
# (constant index_map, single-buffered); only x/ctx/out stream through the
# pipeline.  Dots accumulate in f32; elementwise math is f32.
# ---------------------------------------------------------------------------
def pmrb_kernel(x_ref, ctx_ref, w0_ref, wc_ref, w1_ref, bias_ref, o_ref):
    cdt = w0_ref.dtype                                    # matmul compute dtype
    x = x_ref[...]                                        # (TB, F) streamed dtype

    b01 = bias_ref[0:1, :]                                # b0f + bcf (f32)
    b1 = bias_ref[1:2, :]                                 # b1f       (f32)

    def lrelu(h):
        return jnp.where(h >= 0, h, LEAKY_SLOPE * h)

    # layer_0 + BN0 and context_layer + BNc (both folded); single bias add.
    out = jnp.dot(x.astype(cdt), w0_ref[...], preferred_element_type=jnp.float32)
    out = out + jnp.dot(ctx_ref[...].astype(cdt), wc_ref[...],
                        preferred_element_type=jnp.float32)
    h = lrelu(out + b01)                                  # Dropout(p=0) == identity
    # layer_1 + BN1 (folded)
    out = jnp.dot(h.astype(cdt), w1_ref[...], preferred_element_type=jnp.float32) + b1
    o_ref[...] = lrelu(out + x.astype(jnp.float32)).astype(o_ref.dtype)


# ---------------------------------------------------------------------------
# Wrapper: tiling, specs, VMEM budget, cost estimate.
# ---------------------------------------------------------------------------
def _round_up(n, m):
    return ((n + m - 1) // m) * m


def _vmem_usable_bytes():
    # ~80% of this generation's per-core VMEM (headroom for compiler scratch):
    # v5e/v6e 128 MiB -> ~102 MiB, v7x 64 MiB/TC -> ~51 MiB.
    try:
        cap = int(pltpu.get_tpu_info().vmem_capacity_bytes)
    except Exception:
        cap = 64 * 1024 * 1024     # conservative fallback (v7x per-core)
    return max(16 * 1024 * 1024, int(cap * 0.8))


def _resident_spec(shape, single_buffer):
    n = len(shape)

    def index_map(i):
        return (0,) * n

    if single_buffer:
        try:
            # Constant index_map + single buffer: fetched once, stays resident.
            return pl.BlockSpec(shape, index_map, pipeline_mode=pl.Buffered(1))
        except Exception:
            pass                   # older jax without pipeline_mode: default 2-buf
    return pl.BlockSpec(shape, index_map)


def pmrb_forward(x, ctx, w0f, wcf, w1f, bias_pack, *, block_b=1024,
                 out_dtype=None, single_buffer_weights=True):
    """Gridded, pipelined forward.  Params must come from fold_params()."""
    B, F = x.shape
    C = ctx.shape[1]

    # Stream activations at the weights' compute dtype (bf16 by default).
    stream_dtype = w0f.dtype
    out_dtype = stream_dtype if out_dtype is None else out_dtype
    x = x.astype(stream_dtype)
    ctx = ctx.astype(stream_dtype)

    xbytes = jnp.dtype(stream_dtype).itemsize
    obytes = jnp.dtype(out_dtype).itemsize
    wbytes = jnp.dtype(w0f.dtype).itemsize
    align = 16 if xbytes < 4 else 8           # bf16 packs 16 rows per sublane tile

    # Batch tile: one aligned tile for small batches (amortizes the ~0.35 µs
    # per-grid-step overhead); for larger batches cap TB so the grid has >= 2
    # blocks and the "parallel" axis can shard across both v7x TensorCores.
    if B <= min(block_b, 512):
        TB = _round_up(max(B, align), align)
    else:
        TB = max(align, min(_round_up(block_b, align),
                            _round_up(-(-B // 2), align)))
    num_blocks = -(-B // TB)
    Bp = num_blocks * TB
    if Bp != B:                               # pad batch to whole tiles
        x = jnp.pad(x, ((0, Bp - B), (0, 0)))
        ctx = jnp.pad(ctx, ((0, Bp - B), (0, 0)))

    # VMEM budget: residents counted once (single-buffered), streamed tiles
    # double-buffered, capped at ~80% of per-core VMEM for this generation.
    resident = (2 * F * F + C * F) * wbytes + 8 * F * 4
    if not single_buffer_weights:
        resident *= 2
    streamed = 2 * (TB * F * xbytes + TB * C * xbytes + TB * F * obytes)
    vmem_needed = resident + streamed + (2 << 20)
    vmem_bytes = int(max(16 << 20, min(vmem_needed, _vmem_usable_bytes())))

    cost = pl.CostEstimate(
        flops=2 * Bp * (2 * F * F + C * F),
        transcendentals=0,
        bytes_accessed=(Bp * (F + C) * xbytes + Bp * F * obytes
                        + (2 * F * F + C * F) * wbytes + 8 * F * 4),
    )

    out = pl.pallas_call(
        pmrb_kernel,
        out_shape=jax.ShapeDtypeStruct((Bp, F), out_dtype),
        grid_spec=pltpu.PrefetchScalarGridSpec(
            num_scalar_prefetch=0,
            grid=(num_blocks,),
            in_specs=[
                pl.BlockSpec((TB, F), lambda i: (i, 0)),          # x tile (streamed)
                pl.BlockSpec((TB, C), lambda i: (i, 0)),          # ctx tile (streamed)
                _resident_spec((F, F), single_buffer_weights),    # W0f (resident)
                _resident_spec((C, F), single_buffer_weights),    # Wcf (resident)
                _resident_spec((F, F), single_buffer_weights),    # W1f (resident)
                _resident_spec((8, F), single_buffer_weights),    # fused biases
            ],
            out_specs=pl.BlockSpec((TB, F), lambda i: (i, 0)),
        ),
        compiler_params=pltpu.CompilerParams(
            dimension_semantics=("parallel",),                    # megacore on v7x
            vmem_limit_bytes=vmem_bytes,
        ),
        cost_estimate=cost,
    )(x, ctx, w0f, wcf, w1f, bias_pack)
    return out[:B]
    # TODO(synk): fusing the K=32 context matmul into layer_0 via a stacked
    # (F+C, F) weight needs the [x||ctx] concat produced for free upstream;
    # a wrapper-side concat would add HBM traffic on this bandwidth-bound kernel.


# ---------------------------------------------------------------------------
# Pure-JAX unfused reference (original module math) for correctness checking.
# ---------------------------------------------------------------------------
def reference(x, ctx, w0, m0, b0, w1, m1, b1, wc, bc, bn0, bnc, bn1):
    hp = lax.Precision.HIGHEST

    def bn(h, p):
        g, b, mu, va = p
        return (h - mu) * lax.rsqrt(va + EPS) * g + b

    def lrelu(h):
        return jnp.where(h >= 0, h, LEAKY_SLOPE * h)

    out = jnp.dot(x, (w0 * m0).T, precision=hp) + b0
    out = bn(out, bn0)
    c = jnp.dot(ctx, wc.T, precision=hp) + bc
    c = bn(c, bnc)
    h = lrelu(out + c)
    out = jnp.dot(h, (w1 * m1).T, precision=hp) + b1
    out = bn(out, bn1)
    return lrelu(out + x)


if __name__ == "__main__":
    # Small shapes consistent with the module; F = 128 keeps the feature /
    # output dim lane-dense (full 128-lane vregs, unmasked stores).
    B, F, C = 200, 128, 32                  # batch, features, context_features
    ar_features, patch_size = 32, 4
    in_patchs = F // patch_size             # 32
    ar_patchs = ar_features // patch_size   # 8

    # in_degrees chosen like the out_degrees of a preceding hidden PMADE layer,
    # so the module's residual-degree assert (out_degrees >= in_degrees) holds.
    in_degrees = (jnp.arange(in_patchs, dtype=jnp.int32) % max(1, ar_patchs - 1)
                  + min(1, ar_patchs - 1))

    m0, deg0 = _hidden_mask_and_degrees(in_degrees, in_patchs, ar_patchs, patch_size)
    m1, deg1 = _hidden_mask_and_degrees(deg0, in_patchs, ar_patchs, patch_size)
    assert bool(jnp.all(deg1 >= in_degrees)), "residual-degree constraint violated"

    # Deterministic synthetic parameters.
    key = jax.random.PRNGKey(0)
    ks = jax.random.split(key, 12)
    lim = 1.0 / math.sqrt(F)
    limc = 1.0 / math.sqrt(C)
    w0 = jax.random.uniform(ks[0], (F, F), jnp.float32, -lim, lim)
    b0 = jax.random.uniform(ks[1], (F,), jnp.float32, -lim, lim)
    w1 = jax.random.uniform(ks[2], (F, F), jnp.float32, -lim, lim)
    b1 = jax.random.uniform(ks[3], (F,), jnp.float32, -lim, lim)
    wc = jax.random.uniform(ks[4], (F, C), jnp.float32, -limc, limc)
    bc = jax.random.uniform(ks[5], (F,), jnp.float32, -limc, limc)

    # Eval-mode BatchNorm1d parameters/statistics (deterministic, non-trivial).
    def bn_params(k):
        k1, k2, k3, k4 = jax.random.split(k, 4)
        g = 1.0 + 0.1 * jax.random.uniform(k1, (F,), jnp.float32, -1.0, 1.0)
        b = 0.1 * jax.random.uniform(k2, (F,), jnp.float32, -1.0, 1.0)
        mu = 0.1 * jax.random.uniform(k3, (F,), jnp.float32, -1.0, 1.0)
        va = 1.0 + 0.1 * jax.random.uniform(k4, (F,), jnp.float32, -1.0, 1.0)
        return g, b, mu, va

    bn0, bnc, bn1 = bn_params(ks[6]), bn_params(ks[7]), bn_params(ks[8])

    x = jax.random.normal(ks[9], (B, F), jnp.float32)
    ctx = jax.random.normal(ks[10], (B, C), jnp.float32)

    ref = reference(x, ctx, w0, m0, b0, w1, m1, b1, wc, bc, bn0, bnc, bn1)

    def run(params, **kw):
        try:
            fwd = jax.jit(functools.partial(pmrb_forward, **kw))
            return jax.block_until_ready(fwd(x, ctx, *params))
        except Exception:
            # Fallback for jax versions without single-buffered resident specs.
            kw = dict(kw, single_buffer_weights=False)
            fwd = jax.jit(functools.partial(pmrb_forward, **kw))
            return jax.block_until_ready(fwd(x, ctx, *params))

    # Default path: bf16 weights + bf16 streamed x/ctx + bf16 output
    # (HBM-bound kernel -> halved streamed bytes), f32 accumulation/elementwise.
    params_bf16 = fold_params(w0, m0, b0, w1, m1, b1, wc, bc, bn0, bnc, bn1)
    out_bf16 = run(params_bf16)
    assert out_bf16.shape == (B, F) and out_bf16.dtype == jnp.bfloat16
    assert jnp.allclose(out_bf16.astype(jnp.float32), ref, rtol=6e-2, atol=6e-2), \
        "bf16 kernel/reference mismatch"

    # Portable f32 path (f32 weights/activations/output) — exact-ish everywhere.
    params_f32 = fold_params(w0, m0, b0, w1, m1, b1, wc, bc, bn0, bnc, bn1,
                             compute_dtype=jnp.float32)
    out_f32 = run(params_f32)
    assert out_f32.shape == (B, F) and out_f32.dtype == jnp.float32
    assert jnp.allclose(out_f32, ref, rtol=2e-2, atol=2e-2), \
        "f32 kernel/reference mismatch"

    # TODO(synk): BatchNorm1d is folded in eval mode (running stats); training-mode
    # batch statistics are not computed in-kernel.
    print("KERNEL_OK")
</pallas_src>

<mosaic_0001>
module attributes {stable_mosaic.version = 11 : i64} {
  func.func @pmrb_kernel(%arg0: i32, %arg1: memref<208x128xbf16, #tpu.memory_space<vmem>>, %arg2: memref<208x32xbf16, #tpu.memory_space<vmem>>, %arg3: memref<128x128xbf16, #tpu.memory_space<vmem>>, %arg4: memref<32x128xbf16, #tpu.memory_space<vmem>>, %arg5: memref<128x128xbf16, #tpu.memory_space<vmem>>, %arg6: memref<8x128xf32, #tpu.memory_space<vmem>>, %arg7: memref<208x128xbf16, #tpu.memory_space<vmem>>) attributes {dimension_semantics = [#tpu.dimension_semantics<parallel>], iteration_bounds = array<i64: 1>, scalar_prefetch = 0 : i64, scratch_operands = 0 : i64, tpu.core_type = #tpu.core_type<tc>, window_params = [{transform_indices = @transform_0, window_bounds = array<i64: 208, 128>}, {transform_indices = @transform_1, window_bounds = array<i64: 208, 32>}, {pipeline_mode = #tpu.pipeline_mode<synchronous>, transform_indices = @transform_2, window_bounds = array<i64: 128, 128>}, {pipeline_mode = #tpu.pipeline_mode<synchronous>, transform_indices = @transform_3, window_bounds = array<i64: 32, 128>}, {pipeline_mode = #tpu.pipeline_mode<synchronous>, transform_indices = @transform_4, window_bounds = array<i64: 128, 128>}, {pipeline_mode = #tpu.pipeline_mode<synchronous>, transform_indices = @transform_5, window_bounds = array<i64: 8, 128>}, {transform_indices = @transform_6, window_bounds = array<i64: 208, 128>}]} {
    %c0 = arith.constant 0 : index
    %c0_0 = arith.constant 0 : index
    %0 = vector.load %arg1[%c0, %c0_0] : memref<208x128xbf16, #tpu.memory_space<vmem>>, vector<208x128xbf16>
    %c0_1 = arith.constant 0 : index
    %c0_2 = arith.constant 0 : index
    %1 = vector.load %arg6[%c0_1, %c0_2] : memref<8x128xf32, #tpu.memory_space<vmem>>, vector<1x128xf32>
    %c1 = arith.constant 1 : index
    %c0_3 = arith.constant 0 : index
    %2 = vector.load %arg6[%c1, %c0_3] : memref<8x128xf32, #tpu.memory_space<vmem>>, vector<1x128xf32>
    %c0_4 = arith.constant 0 : index
    %c0_5 = arith.constant 0 : index
    %3 = vector.load %arg3[%c0_4, %c0_5] : memref<128x128xbf16, #tpu.memory_space<vmem>>, vector<128x128xbf16>
    %cst = arith.constant dense<0.000000e+00> : vector<208x128xf32>
    %4 = tpu.matmul %0, %3, %cst {dimension_numbers = #tpu.dot_dimension_numbers<[1], [0], [0], [1], [0, 0, 1, 1], [], []>} : vector<208x128xbf16>, vector<128x128xbf16>, vector<208x128xf32> -> vector<208x128xf32>
    %c0_6 = arith.constant 0 : index
    %c0_7 = arith.constant 0 : index
    %5 = vector.load %arg2[%c0_6, %c0_7] : memref<208x32xbf16, #tpu.memory_space<vmem>>, vector<208x32xbf16>
    %c0_8 = arith.constant 0 : index
    %c0_9 = arith.constant 0 : index
    %6 = vector.load %arg4[%c0_8, %c0_9] : memref<32x128xbf16, #tpu.memory_space<vmem>>, vector<32x128xbf16>
    %cst_10 = arith.constant dense<0.000000e+00> : vector<208x128xf32>
    %7 = tpu.matmul %5, %6, %cst_10 {dimension_numbers = #tpu.dot_dimension_numbers<[1], [0], [0], [1], [0, 0, 1, 1], [], []>} : vector<208x32xbf16>, vector<32x128xbf16>, vector<208x128xf32> -> vector<208x128xf32>
    %8 = arith.addf %4, %7 : vector<208x128xf32>
    %9 = vector.broadcast %1 : vector<1x128xf32> to vector<208x128xf32>
    %10 = arith.addf %8, %9 : vector<208x128xf32>
    %cst_11 = arith.constant 0.000000e+00 : f32
    %11 = vector.broadcast %cst_11 : f32 to vector<208x128xf32>
    %12 = arith.cmpf oge, %10, %11 : vector<208x128xf32>
    %cst_12 = arith.constant 0.00999999977 : f32
    %13 = vector.broadcast %cst_12 : f32 to vector<208x128xf32>
    %14 = arith.mulf %13, %10 : vector<208x128xf32>
    %15 = arith.select %12, %10, %14 : vector<208x128xi1>, vector<208x128xf32>
    %16 = arith.truncf %15 : vector<208x128xf32> to vector<208x128xbf16>
    %c0_13 = arith.constant 0 : index
    %c0_14 = arith.constant 0 : index
    %17 = vector.load %arg5[%c0_13, %c0_14] : memref<128x128xbf16, #tpu.memory_space<vmem>>, vector<128x128xbf16>
    %cst_15 = arith.constant dense<0.000000e+00> : vector<208x128xf32>
    %18 = tpu.matmul %16, %17, %cst_15 {dimension_numbers = #tpu.dot_dimension_numbers<[1], [0], [0], [1], [0, 0, 1, 1], [], []>} : vector<208x128xbf16>, vector<128x128xbf16>, vector<208x128xf32> -> vector<208x128xf32>
    %19 = vector.broadcast %2 : vector<1x128xf32> to vector<208x128xf32>
    %20 = arith.addf %18, %19 : vector<208x128xf32>
    %21 = arith.extf %0 : vector<208x128xbf16> to vector<208x128xf32>
    %22 = arith.addf %20, %21 : vector<208x128xf32>
    %cst_16 = arith.constant 0.000000e+00 : f32
    %23 = vector.broadcast %cst_16 : f32 to vector<208x128xf32>
    %24 = arith.cmpf oge, %22, %23 : vector<208x128xf32>
    %cst_17 = arith.constant 0.00999999977 : f32
    %25 = vector.broadcast %cst_17 : f32 to vector<208x128xf32>
    %26 = arith.mulf %25, %22 : vector<208x128xf32>
    %27 = arith.select %24, %22, %26 : vector<208x128xi1>, vector<208x128xf32>
    %28 = arith.truncf %27 : vector<208x128xf32> to vector<208x128xbf16>
    %c0_18 = arith.constant 0 : index
    %c0_19 = arith.constant 0 : index
    %29 = vector.load %arg7[%c0_18, %c0_19] : memref<208x128xbf16, #tpu.memory_space<vmem>>, vector<208x128xbf16>
    tpu.vector_store %arg7[%c0_18, %c0_19], %28 {strides = array<i32>} : memref<208x128xbf16, #tpu.memory_space<vmem>>, vector<208x128xbf16>,
    return
  }
  func.func @transform_0(%arg0: i32) -> (i32, i32) {
    %c0_i32 = arith.constant 0 : i32
    %c0_i32_0 = arith.constant 0 : i32
    return %arg0, %c0_i32 : i32, i32
  }
  func.func @transform_1(%arg0: i32) -> (i32, i32) {
    %c0_i32 = arith.constant 0 : i32
    %c0_i32_0 = arith.constant 0 : i32
    return %arg0, %c0_i32 : i32, i32
  }
  func.func @transform_2(%arg0: i32) -> (i32, i32) {
    %c0_i32 = arith.constant 0 : i32
    %c0_i32_0 = arith.constant 0 : i32
    %c0_i32_1 = arith.constant 0 : i32
    return %c0_i32, %c0_i32_0 : i32, i32
  }
  func.func @transform_3(%arg0: i32) -> (i32, i32) {
    %c0_i32 = arith.constant 0 : i32
    %c0_i32_0 = arith.constant 0 : i32
    %c0_i32_1 = arith.constant 0 : i32
    return %c0_i32, %c0_i32_0 : i32, i32
  }
  func.func @transform_4(%arg0: i32) -> (i32, i32) {
    %c0_i32 = arith.constant 0 : i32
    %c0_i32_0 = arith.constant 0 : i32
    %c0_i32_1 = arith.constant 0 : i32
    return %c0_i32, %c0_i32_0 : i32, i32
  }
  func.func @transform_5(%arg0: i32) -> (i32, i32) {
    %c0_i32 = arith.constant 0 : i32
    %c0_i32_0 = arith.constant 0 : i32
    %c0_i32_1 = arith.constant 0 : i32
    return %c0_i32, %c0_i32_0 : i32, i32
  }
  func.func @transform_6(%arg0: i32) -> (i32, i32) {
    %c0_i32 = arith.constant 0 : i32
    %c0_i32_0 = arith.constant 0 : i32
    return %arg0, %c0_i32 : i32, i32
  }
}

module attributes {stable_mosaic.version = 11 : i64} {
  func.func @pmrb_kernel(%arg0: i32, %arg1: memref<208x128xbf16, #tpu.memory_space<vmem>>, %arg2: memref<208x32xbf16, #tpu.memory_space<vmem>>, %arg3: memref<128x128xbf16, #tpu.memory_space<vmem>>, %arg4: memref<32x128xbf16, #tpu.memory_space<vmem>>, %arg5: memref<128x128xbf16, #tpu.memory_space<vmem>>, %arg6: memref<8x128xf32, #tpu.memory_space<vmem>>, %arg7: memref<208x128xbf16, #tpu.memory_space<vmem>>) attributes {dimension_semantics = [#tpu.dimension_semantics<parallel>], iteration_bounds = array<i64: 1>, scalar_prefetch = 0 : i64, scratch_operands = 0 : i64, tpu.core_type = #tpu.core_type<tc>, window_params = [{transform_indices = @transform_0, window_bounds = array<i64: 208, 128>}, {transform_indices = @transform_1, window_bounds = array<i64: 208, 32>}, {pipeline_mode = #tpu.pipeline_mode<synchronous>, transform_indices = @transform_2, window_bounds = array<i64: 128, 128>}, {pipeline_mode = #tpu.pipeline_mode<synchronous>, transform_indices = @transform_3, window_bounds = array<i64: 32, 128>}, {pipeline_mode = #tpu.pipeline_mode<synchronous>, transform_indices = @transform_4, window_bounds = array<i64: 128, 128>}, {pipeline_mode = #tpu.pipeline_mode<synchronous>, transform_indices = @transform_5, window_bounds = array<i64: 8, 128>}, {transform_indices = @transform_6, window_bounds = array<i64: 208, 128>}]} {
    %c0 = arith.constant 0 : index
    %c0_0 = arith.constant 0 : index
    %0 = vector.load %arg1[%c0, %c0_0] : memref<208x128xbf16, #tpu.memory_space<vmem>>, vector<208x128xbf16>
    %c0_1 = arith.constant 0 : index
    %c0_2 = arith.constant 0 : index
    %1 = vector.load %arg6[%c0_1, %c0_2] : memref<8x128xf32, #tpu.memory_space<vmem>>, vector<1x128xf32>
    %c1 = arith.constant 1 : index
    %c0_3 = arith.constant 0 : index
    %2 = vector.load %arg6[%c1, %c0_3] : memref<8x128xf32, #tpu.memory_space<vmem>>, vector<1x128xf32>
    %c0_4 = arith.constant 0 : index
    %c0_5 = arith.constant 0 : index
    %3 = vector.load %arg3[%c0_4, %c0_5] : memref<128x128xbf16, #tpu.memory_space<vmem>>, vector<128x128xbf16>
    %cst = arith.constant dense<0.000000e+00> : vector<208x128xf32>
    %4 = tpu.matmul %0, %3, %cst {dimension_numbers = #tpu.dot_dimension_numbers<[1], [0], [0], [1], [0, 0, 1, 1], [], []>} : vector<208x128xbf16>, vector<128x128xbf16>, vector<208x128xf32> -> vector<208x128xf32>
    %c0_6 = arith.constant 0 : index
    %c0_7 = arith.constant 0 : index
    %5 = vector.load %arg2[%c0_6, %c0_7] : memref<208x32xbf16, #tpu.memory_space<vmem>>, vector<208x32xbf16>
    %c0_8 = arith.constant 0 : index
    %c0_9 = arith.constant 0 : index
    %6 = vector.load %arg4[%c0_8, %c0_9] : memref<32x128xbf16, #tpu.memory_space<vmem>>, vector<32x128xbf16>
    %cst_10 = arith.constant dense<0.000000e+00> : vector<208x128xf32>
    %7 = tpu.matmul %5, %6, %cst_10 {dimension_numbers = #tpu.dot_dimension_numbers<[1], [0], [0], [1], [0, 0, 1, 1], [], []>} : vector<208x32xbf16>, vector<32x128xbf16>, vector<208x128xf32> -> vector<208x128xf32>
    %8 = arith.addf %4, %7 : vector<208x128xf32>
    %9 = vector.broadcast %1 : vector<1x128xf32> to vector<208x128xf32>
    %10 = arith.addf %8, %9 : vector<208x128xf32>
    %cst_11 = arith.constant 0.000000e+00 : f32
    %11 = vector.broadcast %cst_11 : f32 to vector<208x128xf32>
    %12 = arith.cmpf oge, %10, %11 : vector<208x128xf32>
    %cst_12 = arith.constant 0.00999999977 : f32
    %13 = vector.broadcast %cst_12 : f32 to vector<208x128xf32>
    %14 = arith.mulf %13, %10 : vector<208x128xf32>
    %15 = arith.select %12, %10, %14 : vector<208x128xi1>, vector<208x128xf32>
    %16 = arith.truncf %15 : vector<208x128xf32> to vector<208x128xbf16>
    %c0_13 = arith.constant 0 : index
    %c0_14 = arith.constant 0 : index
    %17 = vector.load %arg5[%c0_13, %c0_14] : memref<128x128xbf16, #tpu.memory_space<vmem>>, vector<128x128xbf16>
    %cst_15 = arith.constant dense<0.000000e+00> : vector<208x128xf32>
    %18 = tpu.matmul %16, %17, %cst_15 {dimension_numbers = #tpu.dot_dimension_numbers<[1], [0], [0], [1], [0, 0, 1, 1], [], []>} : vector<208x128xbf16>, vector<128x128xbf16>, vector<208x128xf32> -> vector<208x128xf32>
    %19 = vector.broadcast %2 : vector<1x128xf32> to vector<208x128xf32>
    %20 = arith.addf %18, %19 : vector<208x128xf32>
    %21 = arith.extf %0 : vector<208x128xbf16> to vector<208x128xf32>
    %22 = arith.addf %20, %21 : vector<208x128xf32>
    %cst_16 = arith.constant 0.000000e+00 : f32
    %23 = vector.broadcast %cst_16 : f32 to vector<208x128xf32>
    %24 = arith.cmpf oge, %22, %23 : vector<208x128xf32>
    %cst_17 = arith.constant 0.00999999977 : f32
    %25 = vector.broadcast %cst_17 : f32 to vector<208x128xf32>
    %26 = arith.mulf %25, %22 : vector<208x128xf32>
    %27 = arith.select %24, %22, %26 : vector<208x128xi1>, vector<208x128xf32>
    %28 = arith.truncf %27 : vector<208x128xf32> to vector<208x128xbf16>
    %c0_18 = arith.constant 0 : index
    %c0_19 = arith.constant 0 : index
    %29 = vector.load %arg7[%c0_18, %c0_19] : memref<208x128xbf16, #tpu.memory_space<vmem>>, vector<208x128xbf16>
    tpu.vector_store %arg7[%c0_18, %c0_19], %28 {strides = array<i32>} : memref<208x128xbf16, #tpu.memory_space<vmem>>, vector<208x128xbf16>,
    return
  }
  func.func @transform_0(%arg0: i32) -> (i32, i32) {
    %c0_i32 = arith.constant 0 : i32
    %c0_i32_0 = arith.constant 0 : i32
    return %arg0, %c0_i32 : i32, i32
  }
  func.func @transform_1(%arg0: i32) -> (i32, i32) {
    %c0_i32 = arith.constant 0 : i32
    %c0_i32_0 = arith.constant 0 : i32
    return %arg0, %c0_i32 : i32, i32
  }
  func.func @transform_2(%arg0: i32) -> (i32, i32) {
    %c0_i32 = arith.constant 0 : i32
    %c0_i32_0 = arith.constant 0 : i32
    %c0_i32_1 = arith.constant 0 : i32
    return %c0_i32, %c0_i32_0 : i32, i32
  }
  func.func @transform_3(%arg0: i32) -> (i32, i32) {
    %c0_i32 = arith.constant 0 : i32
    %c0_i32_0 = arith.constant 0 : i32
    %c0_i32_1 = arith.constant 0 : i32
    return %c0_i32, %c0_i32_0 : i32, i32
  }
  func.func @transform_4(%arg0: i32) -> (i32, i32) {
    %c0_i32 = arith.constant 0 : i32
    %c0_i32_0 = arith.constant 0 : i32
    %c0_i32_1 = arith.constant 0 : i32
    return %c0_i32, %c0_i32_0 : i32, i32
  }
  func.func @transform_5(%arg0: i32) -> (i32, i32) {
    %c0_i32 = arith.constant 0 : i32
    %c0_i32_0 = arith.constant 0 : i32
    %c0_i32_1 = arith.constant 0 : i32
    return %c0_i32, %c0_i32_0 : i32, i32
  }
  func.func @transform_6(%arg0: i32) -> (i32, i32) {
    %c0_i32 = arith.constant 0 : i32
    %c0_i32_0 = arith.constant 0 : i32
    return %arg0, %c0_i32 : i32, i32
  }
}

</mosaic_0001>

<llo_original>
// kernel: pmrb_forward.1
$region0: #{pmrb_forward.1}
  #allocation0 [shape = 'u32[]', space=smem, size = 0x4, offset = 0x4, fixed_abs, tag = 'smem constant byte address 0x4 - core index']
  #allocation1 [shape = 'u32[144,128]{1,0:T(1,128)}', space=vmem, size = 0x12000, scoped, tag = 'internal scratch']
  %s0 = inlined_call_operand.vmem [shape: bf16[208,128], index: 0, kind: input, shape index: {}]
  %s1 = inlined_call_operand.vmem [shape: bf16[208,32], index: 1, kind: input, shape index: {}]
  %s2 = inlined_call_operand.vmem [shape: bf16[128,128], index: 2, kind: input, shape index: {}]
  %s3 = inlined_call_operand.vmem [shape: bf16[32,128], index: 3, kind: input, shape index: {}]
  %s4 = inlined_call_operand.vmem [shape: bf16[128,128], index: 4, kind: input, shape index: {}]
  %s5 = inlined_call_operand.vmem [shape: f32[8,128], index: 5, kind: input, shape index: {}]
  %s6 = inlined_call_operand.vmem [shape: bf16[208,128], index: 6, kind: output, shape index: {}]
  %s7 = sld [smem:[#allocation0]]
  $region34: #{pmrb_forward.1} parent=0
    _
  %s9 = ssub.s32 1, %s7
  %s10 = scalar_select 0, %s9, %s7
  // Predicated region
  $region2: #{pmrb_forward.1} parent=0 // pred_check
    _
  $region3: #{pmrb_forward.1} parent=0 // pred_check_branch
    %12 = sbr.rel (0) target = $region5
  $region4: #{pmrb_forward.1} parent=0 // pred_region
    _
  $region5: #{pmrb_forward.1} parent=0 // pred_fallthru
    _
  // Predicated region
  $region6: #{pmrb_forward.1} parent=0 // pred_check
    _
  $region7: #{pmrb_forward.1} parent=0 // pred_check_branch
    %14 = sbr.rel (0) target = $region9
  $region8: #{pmrb_forward.1} parent=0 // pred_region
    _
  $region9: #{pmrb_forward.1} parent=0 // pred_fallthru
    _
  // Predicated region
  $region10: #{pmrb_forward.1} parent=0 // pred_check
    _
  $region11: #{pmrb_forward.1} parent=0 // pred_check_branch
    %16 = sbr.rel (0) target = $region13
  $region12: #{pmrb_forward.1} parent=0 // pred_region
    _
  $region13: #{pmrb_forward.1} parent=0 // pred_fallthru
    _
  // Predicated region
  $region14: #{pmrb_forward.1} parent=0 // pred_check
    _
  $region15: #{pmrb_forward.1} parent=0 // pred_check_branch
    %18 = sbr.rel (0) target = $region17
  $region16: #{pmrb_forward.1} parent=0 // pred_region
    _
  $region17: #{pmrb_forward.1} parent=0 // pred_fallthru
    _
  // Predicated region
  $region18: #{pmrb_forward.1} parent=0 // pred_check
    _
  $region19: #{pmrb_forward.1} parent=0 // pred_check_branch
    %20 = sbr.rel (0) target = $region21
  $region20: #{pmrb_forward.1} parent=0 // pred_region
    _
  $region21: #{pmrb_forward.1} parent=0 // pred_fallthru
    _
  // Predicated region
  $region22: #{pmrb_forward.1} parent=0 // pred_check
    _
  $region23: #{pmrb_forward.1} parent=0 // pred_check_branch
    %22 = sbr.rel (0) target = $region25
  $region24: #{pmrb_forward.1} parent=0 // pred_region
    _
  $region25: #{pmrb_forward.1} parent=0 // pred_fallthru
    _
  %v24 = vld [vmem:[%s0] sm:$0xf]
  %v25 = vld [vmem:[%s0 + $0x4] sm:$0xf]
  %v26 = vld [vmem:[%s0 + $0x8] sm:$0xf]
  %v27 = vld [vmem:[%s0 + $0xc] sm:$0xf]
  %v28 = vld [vmem:[%s0 + $0x10] sm:$0xf]
  %v29 = vld [vmem:[%s0 + $0x14] sm:$0xf]
  %v30 = vld [vmem:[%s0 + $0x18] sm:$0xf]
  %v31 = vld [vmem:[%s0 + $0x1c] sm:$0xf]
  %v32 = vld [vmem:[%s0 + $0x20] sm:$0xf]
  %v33 = vld [vmem:[%s0 + $0x24] sm:$0xf]
  %v34 = vld [vmem:[%s0 + $0x28] sm:$0xf]
  %v35 = vld [vmem:[%s0 + $0x2c] sm:$0xf]
  %v36 = vld [vmem:[%s0 + $0x30] sm:$0xf]
  %v37 = vld [vmem:[%s0 + $0x34] sm:$0xf]
  %v38 = vld [vmem:[%s0 + $0x38] sm:$0xf]
  %v39 = vld [vmem:[%s0 + $0x3c] sm:$0xf]
  %v40 = vld [vmem:[%s0 + $0x40] sm:$0xf]
  %v41 = vld [vmem:[%s0 + $0x44] sm:$0xf]
  %v42 = vld [vmem:[%s0 + $0x48] sm:$0xf]
  %v43 = vld [vmem:[%s0 + $0x4c] sm:$0xf]
  %v44 = vld [vmem:[%s0 + $0x50] sm:$0xf]
  %v45 = vld [vmem:[%s0 + $0x54] sm:$0xf]
  %v46 = vld [vmem:[%s0 + $0x58] sm:$0xf]
  %v47 = vld [vmem:[%s0 + $0x5c] sm:$0xf]
  %v48 = vld [vmem:[%s0 + $0x60] sm:$0xf]
  %v49 = vld [vmem:[%s0 + $0x64] sm:$0xf]
  %v50 = vld [vmem:[%s5] sm:$0x1]
  %v51 = vld [vmem:[%s5 + $0x1] sm:$0x1]
  %v52 = vld [vmem:[%s2] sm:$0xf]
  %v53 = vld [vmem:[%s2 + $0x4] sm:$0xf]
  %v54 = vld [vmem:[%s2 + $0x8] sm:$0xf]
  %v55 = vld [vmem:[%s2 + $0xc] sm:$0xf]
  %v56 = vld [vmem:[%s2 + $0x10] sm:$0xf]
  %v57 = vld [vmem:[%s2 + $0x14] sm:$0xf]
  %v58 = vld [vmem:[%s2 + $0x18] sm:$0xf]
  %v59 = vld [vmem:[%s2 + $0x1c] sm:$0xf]
  %v60 = vld [vmem:[%s2 + $0x20] sm:$0xf]
  %v61 = vld [vmem:[%s2 + $0x24] sm:$0xf]
  %v62 = vld [vmem:[%s2 + $0x28] sm:$0xf]
  %v63 = vld [vmem:[%s2 + $0x2c] sm:$0xf]
  %v64 = vld [vmem:[%s2 + $0x30] sm:$0xf]
  %v65 = vld [vmem:[%s2 + $0x34] sm:$0xf]
  %v66 = vld [vmem:[%s2 + $0x38] sm:$0xf]
  %v67 = vld [vmem:[%s2 + $0x3c] sm:$0xf]
  %v68 = vld [vmem:[%s1] sm:$0xf]
  %v69 = vld [vmem:[%s1 + $0x4] sm:$0xf]
  %v70 = vld [vmem:[%s1 + $0x8] sm:$0xf]
  %v71 = vld [vmem:[%s1 + $0xc] sm:$0xf]
  %v72 = vld [vmem:[%s1 + $0x10] sm:$0xf]
  %v73 = vld [vmem:[%s1 + $0x14] sm:$0xf]
  %v74 = vld [vmem:[%s1 + $0x18] sm:$0xf]
  %v75 = vld [vmem:[%s1 + $0x1c] sm:$0xf]
  %v76 = vld [vmem:[%s1 + $0x20] sm:$0xf]
  %v77 = vld [vmem:[%s1 + $0x24] sm:$0xf]
  %v78 = vld [vmem:[%s1 + $0x28] sm:$0xf]
  %v79 = vld [vmem:[%s1 + $0x2c] sm:$0xf]
  %v80 = vld [vmem:[%s1 + $0x30] sm:$0xf]
  %v81 = vld [vmem:[%s1 + $0x34] sm:$0xf]
  %v82 = vld [vmem:[%s1 + $0x38] sm:$0xf]
  %v83 = vld [vmem:[%s1 + $0x3c] sm:$0xf]
  %v84 = vld [vmem:[%s1 + $0x40] sm:$0xf]
  %v85 = vld [vmem:[%s1 + $0x44] sm:$0xf]
  %v86 = vld [vmem:[%s1 + $0x48] sm:$0xf]
  %v87 = vld [vmem:[%s1 + $0x4c] sm:$0xf]
  %v88 = vld [vmem:[%s1 + $0x50] sm:$0xf]
  %v89 = vld [vmem:[%s1 + $0x54] sm:$0xf]
  %v90 = vld [vmem:[%s1 + $0x58] sm:$0xf]
  %v91 = vld [vmem:[%s1 + $0x5c] sm:$0xf]
  %v92 = vld [vmem:[%s1 + $0x60] sm:$0xf]
  %v93 = vld [vmem:[%s1 + $0x64] sm:$0xf]
  %v94 = vld [vmem:[%s3] sm:$0xf]
  %v95 = vld [vmem:[%s3 + $0x4] sm:$0xf]
  %v96 = vld [vmem:[%s3 + $0x8] sm:$0xf]
  %v97 = vld [vmem:[%s3 + $0xc] sm:$0xf]
  %v124 = vunpack.c.l.b16 %v68
  %v125 = vunpack.c.l.b16 %v69
  %v126 = vunpack.c.l.b16 %v70
  %v127 = vunpack.c.l.b16 %v71
  %v128 = vunpack.c.l.b16 %v72
  %v129 = vunpack.c.l.b16 %v73
  %v130 = vunpack.c.l.b16 %v74
  %v131 = vunpack.c.l.b16 %v75
  %v132 = vunpack.c.l.b16 %v76
  %v133 = vunpack.c.l.b16 %v77
  %v134 = vunpack.c.l.b16 %v78
  %v135 = vunpack.c.l.b16 %v79
  %v136 = vunpack.c.l.b16 %v80
  %v137 = vunpack.c.l.b16 %v81
  %v138 = vunpack.c.l.b16 %v82
  %v139 = vunpack.c.l.b16 %v83
  %v140 = vunpack.c.l.b16 %v84
  %v141 = vunpack.c.l.b16 %v85
  %v142 = vunpack.c.l.b16 %v86
  %v143 = vunpack.c.l.b16 %v87
  %v144 = vunpack.c.l.b16 %v88
  %v145 = vunpack.c.l.b16 %v89
  %v146 = vunpack.c.l.b16 %v90
  %v147 = vunpack.c.l.b16 %v91
  %v148 = vunpack.c.l.b16 %v92
  %v149 = vunpack.c.l.b16 %v93
  %v150 = vpack.c.b16 %v125, %v124
  %v151 = vpack.c.b16 %v127, %v126
  %v152 = vpack.c.b16 %v129, %v128
  %v153 = vpack.c.b16 %v131, %v130
  %v154 = vpack.c.b16 %v133, %v132
  %v155 = vpack.c.b16 %v135, %v134
  %v156 = vpack.c.b16 %v137, %v136
  %v157 = vpack.c.b16 %v139, %v138
  %v158 = vpack.c.b16 %v141, %v140
  %v159 = vpack.c.b16 %v143, %v142
  %v160 = vpack.c.b16 %v145, %v144
  %v161 = vpack.c.b16 %v147, %v146
  %v162 = vpack.c.b16 %v149, %v148
  %v167 = vunpack.c.l.b16 %v94
  %v168 = vunpack.c.l.b16 %v95
  %v169 = vunpack.c.l.b16 %v96
  %v170 = vunpack.c.l.b16 %v97
  %v171 = vpack.c.b16 %v168, %v167
  %v172 = vpack.c.b16 %v170, %v169
  %vm175 = vcmask 261120
  %v177 = vsel %vm175, %v150, 0
  %v180 = vsel %vm175, %v151, 0
  %v183 = vsel %vm175, %v152, 0
  %v186 = vsel %vm175, %v153, 0
  %v189 = vsel %vm175, %v154, 0
  %v192 = vsel %vm175, %v155, 0
  %v195 = vsel %vm175, %v156, 0
  %v198 = vsel %vm175, %v157, 0
  %v201 = vsel %vm175, %v158, 0
  %v204 = vsel %vm175, %v159, 0
  %v207 = vsel %vm175, %v160, 0
  %v210 = vsel %vm175, %v161, 0
  %v213 = vsel %vm175, %v162, 0
  %215 = vmatprep.subr.bf16.mxu0 0
  %216 = vmatpush1.bf16.msra.mxu0 %v171
  %217 = vmatprep.subr.bf16.mxu0 0
  %218 = vmatpush1.bf16.msra.mxu0 %v172
  %219 = vmatprep.subr.bf16.mxu0 0
  %220 = vmatpush1.bf16.msra.mxu0 0
  %221 = vmatprep.subr.bf16.mxu0 0
  %222 = vmatpush1.bf16.msra.mxu0 0
  %223 = vmatprep.subr.bf16.mxu0 0
  %224 = vmatpush1.bf16.msra.mxu0 0
  %225 = vmatprep.subr.bf16.mxu0 0
  %226 = vmatpush1.bf16.msra.mxu0 0
  %227 = vmatprep.subr.bf16.mxu0 0
  %228 = vmatpush1.bf16.msra.mxu0 0
  %229 = vmatprep.subr.bf16.mxu0 0
  %230 = vmatpush1.bf16.msra.mxu0 0
  %231 = vmatprep.subr.bf16.mxu0 0
  %232 = vmatpush1.bf16.msra.mxu0 0
  %233 = vmatprep.subr.bf16.mxu0 0
  %234 = vmatpush1.bf16.msra.mxu0 0
  %235 = vmatprep.subr.bf16.mxu0 0
  %236 = vmatpush1.bf16.msra.mxu0 0
  %237 = vmatprep.subr.bf16.mxu0 0
  %238 = vmatpush1.bf16.msra.mxu0 0
  %239 = vmatprep.subr.bf16.mxu0 0
  %240 = vmatpush1.bf16.msra.mxu0 0
  %241 = vmatprep.subr.bf16.mxu0 0
  %242 = vmatpush1.bf16.msra.mxu0 0
  %243 = vmatprep.subr.bf16.mxu0 0
  %244 = vmatpush1.bf16.msra.mxu0 0
  %245 = vmatprep.subr.bf16.mxu0 0
  %246 = vmatpush1.bf16.msra.mxu0 0
  %247 = vmatprep.mubr.bf16.mxu0 0
  %248 = vmatmul.mubr.bf16.gmra.mrb[0].mxu0 %v177
  %v249 = vpop.f32.mrb[0].mxu0
  %v250 = vadd.f32 0.0, %v249
  %v251 = vpop.f32.mrb[0].mxu0
  %v252 = vpop.f32.mrb[0].mxu0
  %v253 = vadd.f32 0.0, %v252
  %v254 = vpop.f32.mrb[0].mxu0
  %255 = vmatprep.mubr.bf16.mxu0 0
  %256 = vmatmul.mubr.bf16.gmra.mrb[0].mxu0 %v180
  %v257 = vpop.f32.mrb[0].mxu0
  %v258 = vadd.f32 0.0, %v257
  %v259 = vpop.f32.mrb[0].mxu0
  %v260 = vpop.f32.mrb[0].mxu0
  %v261 = vadd.f32 0.0, %v260
  %v262 = vpop.f32.mrb[0].mxu0
  %263 = vmatprep.mubr.bf16.mxu0 0
  %264 = vmatmul.mubr.bf16.gmra.mrb[0].mxu0 %v183
  %v265 = vpop.f32.mrb[0].mxu0
  %v266 = vadd.f32 0.0, %v265
  %v267 = vpop.f32.mrb[0].mxu0
  %v268 = vpop.f32.mrb[0].mxu0
  %v269 = vadd.f32 0.0, %v268
  %v270 = vpop.f32.mrb[0].mxu0
  %271 = vmatprep.mubr.bf16.mxu0 0
  %272 = vmatmul.mubr.bf16.gmra.mrb[0].mxu0 %v186
  %v273 = vpop.f32.mrb[0].mxu0
  %v274 = vadd.f32 0.0, %v273
  %v275 = vpop.f32.mrb[0].mxu0
  %v276 = vpop.f32.mrb[0].mxu0
  %v277 = vadd.f32 0.0, %v276
  %v278 = vpop.f32.mrb[0].mxu0
  %279 = vmatprep.mubr.bf16.mxu0 0
  %280 = vmatmul.mubr.bf16.gmra.mrb[0].mxu0 %v189
  %v281 = vpop.f32.mrb[0].mxu0
  %v282 = vadd.f32 0.0, %v281
  %v283 = vpop.f32.mrb[0].mxu0
  %v284 = vpop.f32.mrb[0].mxu0
  %v285 = vadd.f32 0.0, %v284
  %v286 = vpop.f32.mrb[0].mxu0
  %287 = vmatprep.mubr.bf16.mxu0 0
  %288 = vmatmul.mubr.bf16.gmra.mrb[0].mxu0 %v192
  %v289 = vpop.f32.mrb[0].mxu0
  %v290 = vadd.f32 0.0, %v289
  %v291 = vpop.f32.mrb[0].mxu0
  %v292 = vpop.f32.mrb[0].mxu0
  %v293 = vadd.f32 0.0, %v292
  %v294 = vpop.f32.mrb[0].mxu0
  %295 = vmatprep.mubr.bf16.mxu0 0
  %296 = vmatmul.mubr.bf16.gmra.mrb[0].mxu0 %v195
  %v297 = vpop.f32.mrb[0].mxu0
  %v298 = vadd.f32 0.0, %v297
  %v299 = vpop.f32.mrb[0].mxu0
  %v300 = vpop.f32.mrb[0].mxu0
  %v301 = vadd.f32 0.0, %v300
  %v302 = vpop.f32.mrb[0].mxu0
  %303 = vmatprep.mubr.bf16.mxu0 0
  %304 = vmatmul.mubr.bf16.gmra.mrb[0].mxu0 %v198
  %v305 = vpop.f32.mrb[0].mxu0
  %v306 = vadd.f32 0.0, %v305
  %v307 = vpop.f32.mrb[0].mxu0
  %v308 = vpop.f32.mrb[0].mxu0
  %v309 = vadd.f32 0.0, %v308
  %v310 = vpop.f32.mrb[0].mxu0
  %311 = vmatprep.mubr.bf16.mxu0 0
  %312 = vmatmul.mubr.bf16.gmra.mrb[0].mxu0 %v201
  %v313 = vpop.f32.mrb[0].mxu0
  %v314 = vadd.f32 0.0, %v313
  %v315 = vpop.f32.mrb[0].mxu0
  %v316 = vpop.f32.mrb[0].mxu0
  %v317 = vadd.f32 0.0, %v316
  %v318 = vpop.f32.mrb[0].mxu0
  %319 = vmatprep.mubr.bf16.mxu0 0
  %320 = vmatmul.mubr.bf16.gmra.mrb[0].mxu0 %v204
  %v321 = vpop.f32.mrb[0].mxu0
  %v322 = vadd.f32 0.0, %v321
  %v323 = vpop.f32.mrb[0].mxu0
  %v324 = vpop.f32.mrb[0].mxu0
  %v325 = vadd.f32 0.0, %v324
  %v326 = vpop.f32.mrb[0].mxu0
  %327 = vmatprep.mubr.bf16.mxu0 0
  %328 = vmatmul.mubr.bf16.gmra.mrb[0].mxu0 %v207
  %v329 = vpop.f32.mrb[0].mxu0
  %v330 = vadd.f32 0.0, %v329
  %v331 = vpop.f32.mrb[0].mxu0
  %v332 = vpop.f32.mrb[0].mxu0
  %v333 = vadd.f32 0.0, %v332
  %v334 = vpop.f32.mrb[0].mxu0
  %335 = vmatprep.mubr.bf16.mxu0 0
  %336 = vmatmul.mubr.bf16.gmra.mrb[0].mxu0 %v210
  %v337 = vpop.f32.mrb[0].mxu0
  %v338 = vadd.f32 0.0, %v337
  %v339 = vpop.f32.mrb[0].mxu0
  %v340 = vpop.f32.mrb[0].mxu0
  %v341 = vadd.f32 0.0, %v340
  %v342 = vpop.f32.mrb[0].mxu0
  %343 = vmatprep.mubr.bf16.mxu0 0
  %344 = vmatmul.mubr.bf16.gmra.mrb[0].mxu0 %v213
  %v345 = vpop.f32.mrb[0].mxu0
  %v346 = vadd.f32 0.0, %v345
  %v347 = vpop.f32.mrb[0].mxu0
  %v348 = vpop.f32.mrb[0].mxu0
  %v349 = vadd.f32 0.0, %v348
  %v350 = vpop.f32.mrb[0].mxu0
  %351 = vdwg.mxu0
  %v378 = vunpack.c.l.b16 %v24
  %v379 = vunpack.c.l.b16 %v25
  %v380 = vunpack.c.l.b16 %v26
  %v381 = vunpack.c.l.b16 %v27
  %v382 = vunpack.c.l.b16 %v28
  %v383 = vunpack.c.l.b16 %v29
  %v384 = vunpack.c.l.b16 %v30
  %v385 = vunpack.c.l.b16 %v31
  %v386 = vunpack.c.l.b16 %v32
  %v387 = vunpack.c.l.b16 %v33
  %v388 = vunpack.c.l.b16 %v34
  %v389 = vunpack.c.l.b16 %v35
  %v390 = vunpack.c.l.b16 %v36
  %v391 = vunpack.c.l.b16 %v37
  %v392 = vunpack.c.l.b16 %v38
  %v393 = vunpack.c.l.b16 %v39
  %v394 = vunpack.c.l.b16 %v40
  %v395 = vunpack.c.l.b16 %v41
  %v396 = vunpack.c.l.b16 %v42
  %v397 = vunpack.c.l.b16 %v43
  %v398 = vunpack.c.l.b16 %v44
  %v399 = vunpack.c.l.b16 %v45
  %v400 = vunpack.c.l.b16 %v46
  %v401 = vunpack.c.l.b16 %v47
  %v402 = vunpack.c.l.b16 %v48
  %v403 = vunpack.c.l.b16 %v49
  %v404 = vpack.c.b16 %v379, %v378
  %v405 = vpack.c.b16 %v381, %v380
  %v406 = vpack.c.b16 %v383, %v382
  %v407 = vpack.c.b16 %v385, %v384
  %v408 = vpack.c.b16 %v387, %v386
  %v409 = vpack.c.b16 %v389, %v388
  %v410 = vpack.c.b16 %v391, %v390
  %v411 = vpack.c.b16 %v393, %v392
  %v412 = vpack.c.b16 %v395, %v394
  %v413 = vpack.c.b16 %v397, %v396
  %v414 = vpack.c.b16 %v399, %v398
  %v415 = vpack.c.b16 %v401, %v400
  %v416 = vpack.c.b16 %v403, %v402
  %v446 = vunpack.c.l.b16 %v52
  %v447 = vunpack.c.l.b16 %v53
  %v448 = vunpack.c.l.b16 %v54
  %v449 = vunpack.c.l.b16 %v55
  %v450 = vunpack.c.l.b16 %v56
  %v451 = vunpack.c.l.b16 %v57
  %v452 = vunpack.c.l.b16 %v58
  %v453 = vunpack.c.l.b16 %v59
  %v454 = vunpack.c.l.b16 %v60
  %v455 = vunpack.c.l.b16 %v61
  %v456 = vunpack.c.l.b16 %v62
  %v457 = vunpack.c.l.b16 %v63
  %v458 = vunpack.c.l.b16 %v64
  %v459 = vunpack.c.l.b16 %v65
  %v460 = vunpack.c.l.b16 %v66
  %v461 = vunpack.c.l.b16 %v67
  %v462 = vpack.c.b16 %v447, %v446
  %v463 = vpack.c.b16 %v449, %v448
  %v464 = vpack.c.b16 %v451, %v450
  %v465 = vpack.c.b16 %v453, %v452
  %v466 = vpack.c.b16 %v455, %v454
  %v467 = vpack.c.b16 %v457, %v456
  %v468 = vpack.c.b16 %v459, %v458
  %v469 = vpack.c.b16 %v461, %v460
  %478 = vmatprep.subr.bf16.mxu0 0
  %479 = vmatpush1.bf16.msra.mxu0 %v462
  %480 = vmatprep.subr.bf16.mxu0 0
  %481 = vmatpush1.bf16.msra.mxu0 %v463
  %482 = vmatprep.subr.bf16.mxu0 0
  %483 = vmatpush1.bf16.msra.mxu0 %v464
  %484 = vmatprep.subr.bf16.mxu0 0
  %485 = vmatpush1.bf16.msra.mxu0 %v465
  %486 = vmatprep.subr.bf16.mxu0 0
  %487 = vmatpush1.bf16.msra.mxu0 %v466
  %488 = vmatprep.subr.bf16.mxu0 0
  %489 = vmatpush1.bf16.msra.mxu0 %v467
  %490 = vmatprep.subr.bf16.mxu0 0
  %491 = vmatpush1.bf16.msra.mxu0 %v468
  %492 = vmatprep.subr.bf16.mxu0 0
  %493 = vmatpush1.bf16.msra.mxu0 %v469
  %494 = vmatprep.subr.bf16.mxu0 0
  %495 = vmatpush1.bf16.msra.mxu0 0
  %496 = vmatprep.subr.bf16.mxu0 0
  %497 = vmatpush1.bf16.msra.mxu0 0
  %498 = vmatprep.subr.bf16.mxu0 0
  %499 = vmatpush1.bf16.msra.mxu0 0
  %500 = vmatprep.subr.bf16.mxu0 0
  %501 = vmatpush1.bf16.msra.mxu0 0
  %502 = vmatprep.subr.bf16.mxu0 0
  %503 = vmatpush1.bf16.msra.mxu0 0
  %504 = vmatprep.subr.bf16.mxu0 0
  %505 = vmatpush1.bf16.msra.mxu0 0
  %506 = vmatprep.subr.bf16.mxu0 0
  %507 = vmatpush1.bf16.msra.mxu0 0
  %508 = vmatprep.subr.bf16.mxu0 0
  %509 = vmatpush1.bf16.msra.mxu0 0
  %510 = vmatprep.mubr.bf16.mxu0 0
  %511 = vmatmul.mubr.bf16.gmra.mrb[0].mxu0 %v404
  %v512 = vpop.f32.mrb[0].mxu0
  %v513 = vadd.f32 %v250, %v512
  %v514 = vpop.f32.mrb[0].mxu0
  %v515 = vpop.f32.mrb[0].mxu0
  %v516 = vadd.f32 %v253, %v515
  %v517 = vpop.f32.mrb[0].mxu0
  %518 = vmatprep.mubr.bf16.mxu0 0
  %519 = vmatmul.mubr.bf16.gmra.mrb[0].mxu0 %v405
  %v520 = vpop.f32.mrb[0].mxu0
  %v521 = vadd.f32 %v258, %v520
  %v522 = vpop.f32.mrb[0].mxu0
  %v523 = vpop.f32.mrb[0].mxu0
  %v524 = vadd.f32 %v261, %v523
  %v525 = vpop.f32.mrb[0].mxu0
  %526 = vmatprep.mubr.bf16.mxu0 0
  %527 = vmatmul.mubr.bf16.gmra.mrb[0].mxu0 %v406
  %v528 = vpop.f32.mrb[0].mxu0
  %v529 = vadd.f32 %v266, %v528
  %v530 = vpop.f32.mrb[0].mxu0
  %v531 = vpop.f32.mrb[0].mxu0
  %v532 = vadd.f32 %v269, %v531
  %v533 = vpop.f32.mrb[0].mxu0
  %534 = vmatprep.mubr.bf16.mxu0 0
  %535 = vmatmul.mubr.bf16.gmra.mrb[0].mxu0 %v407
  %v536 = vpop.f32.mrb[0].mxu0
  %v537 = vadd.f32 %v274, %v536
  %v538 = vpop.f32.mrb[0].mxu0
  %v539 = vpop.f32.mrb[0].mxu0
  %v540 = vadd.f32 %v277, %v539
  %v541 = vpop.f32.mrb[0].mxu0
  %542 = vmatprep.mubr.bf16.mxu0 0
  %543 = vmatmul.mubr.bf16.gmra.mrb[0].mxu0 %v408
  %v544 = vpop.f32.mrb[0].mxu0
  %v545 = vadd.f32 %v282, %v544
  %v546 = vpop.f32.mrb[0].mxu0
  %v547 = vpop.f32.mrb[0].mxu0
  %v548 = vadd.f32 %v285, %v547
  %v549 = vpop.f32.mrb[0].mxu0
  %550 = vmatprep.mubr.bf16.mxu0 0
  %551 = vmatmul.mubr.bf16.gmra.mrb[0].mxu0 %v409
  %v552 = vpop.f32.mrb[0].mxu0
  %v553 = vadd.f32 %v290, %v552
  %v554 = vpop.f32.mrb[0].mxu0
  %v555 = vpop.f32.mrb[0].mxu0
  %v556 = vadd.f32 %v293, %v555
  %v557 = vpop.f32.mrb[0].mxu0
  %558 = vmatprep.mubr.bf16.mxu0 0
  %559 = vmatmul.mubr.bf16.gmra.mrb[0].mxu0 %v410
  %v560 = vpop.f32.mrb[0].mxu0
  %v561 = vadd.f32 %v298, %v560
  %v562 = vpop.f32.mrb[0].mxu0
  %v563 = vpop.f32.mrb[0].mxu0
  %v564 = vadd.f32 %v301, %v563
  %v565 = vpop.f32.mrb[0].mxu0
  %566 = vmatprep.mubr.bf16.mxu0 0
  %567 = vmatmul.mubr.bf16.gmra.mrb[0].mxu0 %v411
  %v568 = vpop.f32.mrb[0].mxu0
  %v569 = vadd.f32 %v306, %v568
  %v570 = vpop.f32.mrb[0].mxu0
  %v571 = vpop.f32.mrb[0].mxu0
  %v572 = vadd.f32 %v309, %v571
  %v573 = vpop.f32.mrb[0].mxu0
  %574 = vmatprep.mubr.bf16.mxu0 0
  %575 = vmatmul.mubr.bf16.gmra.mrb[0].mxu0 %v412
  %v576 = vpop.f32.mrb[0].mxu0
  %v577 = vadd.f32 %v314, %v576
  %v578 = vpop.f32.mrb[0].mxu0
  %v579 = vpop.f32.mrb[0].mxu0
  %v580 = vadd.f32 %v317, %v579
  %v581 = vpop.f32.mrb[0].mxu0
  %582 = vmatprep.mubr.bf16.mxu0 0
  %583 = vmatmul.mubr.bf16.gmra.mrb[0].mxu0 %v413
  %v584 = vpop.f32.mrb[0].mxu0
  %v585 = vadd.f32 %v322, %v584
  %v586 = vpop.f32.mrb[0].mxu0
  %v587 = vpop.f32.mrb[0].mxu0
  %v588 = vadd.f32 %v325, %v587
  %v589 = vpop.f32.mrb[0].mxu0
  %590 = vmatprep.mubr.bf16.mxu0 0
  %591 = vmatmul.mubr.bf16.gmra.mrb[0].mxu0 %v414
  %v592 = vpop.f32.mrb[0].mxu0
  %v593 = vadd.f32 %v330, %v592
  %v594 = vpop.f32.mrb[0].mxu0
  %v595 = vpop.f32.mrb[0].mxu0
  %v596 = vadd.f32 %v333, %v595
  %v597 = vpop.f32.mrb[0].mxu0
  %598 = vmatprep.mubr.bf16.mxu0 0
  %599 = vmatmul.mubr.bf16.gmra.mrb[0].mxu0 %v415
  %v600 = vpop.f32.mrb[0].mxu0
  %v601 = vadd.f32 %v338, %v600
  %v602 = vpop.f32.mrb[0].mxu0
  %v603 = vpop.f32.mrb[0].mxu0
  %v604 = vadd.f32 %v341, %v603
  %v605 = vpop.f32.mrb[0].mxu0
  %606 = vmatprep.mubr.bf16.mxu0 0
  %607 = vmatmul.mubr.bf16.gmra.mrb[0].mxu0 %v416
  %v608 = vpop.f32.mrb[0].mxu0
  %v609 = vadd.f32 %v346, %v608
  %v610 = vpop.f32.mrb[0].mxu0
  %v611 = vpop.f32.mrb[0].mxu0
  %v612 = vadd.f32 %v349, %v611
  %v613 = vpop.f32.mrb[0].mxu0
  %614 = vdwg.mxu0
  %v615 = vlaneseq
  %v616 = vshrl.u32 %v615, 7
  %v617 = vsub.s32 0, %v616
  %v618 = vrot.slane %v50, %v617
  %v619 = vadd.f32 %v513, %v618
  %v620 = vadd.f32 %v516, %v618
  %v621 = vadd.f32 %v521, %v618
  %v622 = vadd.f32 %v524, %v618
  %v623 = vadd.f32 %v529, %v618
  %v624 = vadd.f32 %v532, %v618
  %v625 = vadd.f32 %v537, %v618
  %v626 = vadd.f32 %v540, %v618
  %v627 = vadd.f32 %v545, %v618
  %v628 = vadd.f32 %v548, %v618
  %v629 = vadd.f32 %v553, %v618
  %v630 = vadd.f32 %v556, %v618
  %v631 = vadd.f32 %v561, %v618
  %v632 = vadd.f32 %v564, %v618
  %v633 = vadd.f32 %v569, %v618
  %v634 = vadd.f32 %v572, %v618
  %v635 = vadd.f32 %v577, %v618
  %v636 = vadd.f32 %v580, %v618
  %v637 = vadd.f32 %v585, %v618
  %v638 = vadd.f32 %v588, %v618
  %v639 = vadd.f32 %v593, %v618
  %v640 = vadd.f32 %v596, %v618
  %v641 = vadd.f32 %v601, %v618
  %v642 = vadd.f32 %v604, %v618
  %v643 = vadd.f32 %v609, %v618
  %v644 = vadd.f32 %v612, %v618
  %vm645 = vcmp.ge.f32.partialorder %v619, 0.0
  %vm646 = vcmp.ge.f32.partialorder %v620, 0.0
  %vm647 = vcmp.ge.f32.partialorder %v621, 0.0
  %vm648 = vcmp.ge.f32.partialorder %v622, 0.0
  %vm649 = vcmp.ge.f32.partialorder %v623, 0.0
  %vm650 = vcmp.ge.f32.partialorder %v624, 0.0
  %vm651 = vcmp.ge.f32.partialorder %v625, 0.0
  %vm652 = vcmp.ge.f32.partialorder %v626, 0.0
  %vm653 = vcmp.ge.f32.partialorder %v627, 0.0
  %vm654 = vcmp.ge.f32.partialorder %v628, 0.0
  %vm655 = vcmp.ge.f32.partialorder %v629, 0.0
  %vm656 = vcmp.ge.f32.partialorder %v630, 0.0
  %vm657 = vcmp.ge.f32.partialorder %v631, 0.0
  %vm658 = vcmp.ge.f32.partialorder %v632, 0.0
  %vm659 = vcmp.ge.f32.partialorder %v633, 0.0
  %vm660 = vcmp.ge.f32.partialorder %v634, 0.0
  %vm661 = vcmp.ge.f32.partialorder %v635, 0.0
  %vm662 = vcmp.ge.f32.partialorder %v636, 0.0
  %vm663 = vcmp.ge.f32.partialorder %v637, 0.0
  %vm664 = vcmp.ge.f32.partialorder %v638, 0.0
  %vm665 = vcmp.ge.f32.partialorder %v639, 0.0
  %vm666 = vcmp.ge.f32.partialorder %v640, 0.0
  %vm667 = vcmp.ge.f32.partialorder %v641, 0.0
  %vm668 = vcmp.ge.f32.partialorder %v642, 0.0
  %vm669 = vcmp.ge.f32.partialorder %v643, 0.0
  %vm670 = vcmp.ge.f32.partialorder %v644, 0.0
  %v671 = vmul.f32 %v619, 0.01
  %v672 = vmul.f32 %v620, 0.01
  %v673 = vmul.f32 %v621, 0.01
  %v674 = vmul.f32 %v622, 0.01
  %v675 = vmul.f32 %v623, 0.01
  %v676 = vmul.f32 %v624, 0.01
  %v677 = vmul.f32 %v625, 0.01
  %v678 = vmul.f32 %v626, 0.01
  %v679 = vmul.f32 %v627, 0.01
  %v680 = vmul.f32 %v628, 0.01
  %v681 = vmul.f32 %v629, 0.01
  %v682 = vmul.f32 %v630, 0.01
  %v683 = vmul.f32 %v631, 0.01
  %v684 = vmul.f32 %v632, 0.01
  %v685 = vmul.f32 %v633, 0.01
  %v686 = vmul.f32 %v634, 0.01
  %v687 = vmul.f32 %v635, 0.01
  %v688 = vmul.f32 %v636, 0.01
  %v689 = vmul.f32 %v637, 0.01
  %v690 = vmul.f32 %v638, 0.01
  %v691 = vmul.f32 %v639, 0.01
  %v692 = vmul.f32 %v640, 0.01
  %v693 = vmul.f32 %v641, 0.01
  %v694 = vmul.f32 %v642, 0.01
  %v695 = vmul.f32 %v643, 0.01
  %v696 = vmul.f32 %v644, 0.01
  %v697 = vsel %vm645, %v619, %v671
  %v698 = vsel %vm646, %v620, %v672
  %v699 = vsel %vm647, %v621, %v673
  %v700 = vsel %vm648, %v622, %v674
  %v701 = vsel %vm649, %v623, %v675
  %v702 = vsel %vm650, %v624, %v676
  %v703 = vsel %vm651, %v625, %v677
  %v704 = vsel %vm652, %v626, %v678
  %v705 = vsel %vm653, %v627, %v679
  %v706 = vsel %vm654, %v628, %v680
  %v707 = vsel %vm655, %v629, %v681
  %v708 = vsel %vm656, %v630, %v682
  %v709 = vsel %vm657, %v631, %v683
  %v710 = vsel %vm658, %v632, %v684
  %v711 = vsel %vm659, %v633, %v685
  %v712 = vsel %vm660, %v634, %v686
  %v713 = vsel %vm661, %v635, %v687
  %v714 = vsel %vm662, %v636, %v688
  %v715 = vsel %vm663, %v637, %v689
  %v716 = vsel %vm664, %v638, %v690
  %v717 = vsel %vm665, %v639, %v691
  %v718 = vsel %vm666, %v640, %v692
  %v719 = vsel %vm667, %v641, %v693
  %v720 = vsel %vm668, %v642, %v694
  %v721 = vsel %vm669, %v643, %v695
  %v722 = vsel %vm670, %v644, %v696
  %v723 = vpack.c.bf16 %v698, %v697
  %v724 = vpack.c.bf16 %v700, %v699
  %v725 = vpack.c.bf16 %v702, %v701
  %v726 = vpack.c.bf16 %v704, %v703
  %v727 = vpack.c.bf16 %v706, %v705
  %v728 = vpack.c.bf16 %v708, %v707
  %v729 = vpack.c.bf16 %v710, %v709
  %v730 = vpack.c.bf16 %v712, %v711
  %v731 = vpack.c.bf16 %v714, %v713
  %v732 = vpack.c.bf16 %v716, %v715
  %v733 = vpack.c.bf16 %v718, %v717
  %v734 = vpack.c.bf16 %v720, %v719
  %v735 = vpack.c.bf16 %v722, %v721
  %v736 = vld [vmem:[%s4] sm:$0xf]
  %v737 = vld [vmem:[%s4 + $0x4] sm:$0xf]
  %v738 = vld [vmem:[%s4 + $0x8] sm:$0xf]
  %v739 = vld [vmem:[%s4 + $0xc] sm:$0xf]
  %v740 = vld [vmem:[%s4 + $0x10] sm:$0xf]
  %v741 = vld [vmem:[%s4 + $0x14] sm:$0xf]
  %v742 = vld [vmem:[%s4 + $0x18] sm:$0xf]
  %v743 = vld [vmem:[%s4 + $0x1c] sm:$0xf]
  %v744 = vld [vmem:[%s4 + $0x20] sm:$0xf]
  %v745 = vld [vmem:[%s4 + $0x24] sm:$0xf]
  %v746 = vld [vmem:[%s4 + $0x28] sm:$0xf]
  %v747 = vld [vmem:[%s4 + $0x2c] sm:$0xf]
  %v748 = vld [vmem:[%s4 + $0x30] sm:$0xf]
  %v749 = vld [vmem:[%s4 + $0x34] sm:$0xf]
  %v750 = vld [vmem:[%s4 + $0x38] sm:$0xf]
  %v751 = vld [vmem:[%s4 + $0x3c] sm:$0xf]
  %v752 = vlaneseq
  %v753 = vshrl.u32 %v752, 7
  %v754 = vsub.s32 0, %v753
  %v755 = vrot.slane %v51, %v754
  %v772 = vunpack.c.l.b16 %v736
  %v773 = vunpack.c.l.b16 %v737
  %v774 = vunpack.c.l.b16 %v738
  %v775 = vunpack.c.l.b16 %v739
  %v776 = vunpack.c.l.b16 %v740
  %v777 = vunpack.c.l.b16 %v741
  %v778 = vunpack.c.l.b16 %v742
  %v779 = vunpack.c.l.b16 %v743
  %v780 = vunpack.c.l.b16 %v744
  %v781 = vunpack.c.l.b16 %v745
  %v782 = vunpack.c.l.b16 %v746
  %v783 = vunpack.c.l.b16 %v747
  %v784 = vunpack.c.l.b16 %v748
  %v785 = vunpack.c.l.b16 %v749
  %v786 = vunpack.c.l.b16 %v750
  %v787 = vunpack.c.l.b16 %v751
  %v788 = vpack.c.b16 %v773, %v772
  %v789 = vpack.c.b16 %v775, %v774
  %v790 = vpack.c.b16 %v777, %v776
  %v791 = vpack.c.b16 %v779, %v778
  %v792 = vpack.c.b16 %v781, %v780
  %v793 = vpack.c.b16 %v783, %v782
  %v794 = vpack.c.b16 %v785, %v784
  %v795 = vpack.c.b16 %v787, %v786
  %804 = vmatprep.subr.bf16.mxu0 0
  %805 = vmatpush1.bf16.msra.mxu0 %v788
  %806 = vmatprep.subr.bf16.mxu0 0
  %807 = vmatpush1.bf16.msra.mxu0 %v789
  %808 = vmatprep.subr.bf16.mxu0 0
  %809 = vmatpush1.bf16.msra.mxu0 %v790
  %810 = vmatprep.subr.bf16.mxu0 0
  %811 = vmatpush1.bf16.msra.mxu0 %v791
  %812 = vmatprep.subr.bf16.mxu0 0
  %813 = vmatpush1.bf16.msra.mxu0 %v792
  %814 = vmatprep.subr.bf16.mxu0 0
  %815 = vmatpush1.bf16.msra.mxu0 %v793
  %816 = vmatprep.subr.bf16.mxu0 0
  %817 = vmatpush1.bf16.msra.mxu0 %v794
  %818 = vmatprep.subr.bf16.mxu0 0
  %819 = vmatpush1.bf16.msra.mxu0 %v795
  %820 = vmatprep.subr.bf16.mxu0 0
  %821 = vmatpush1.bf16.msra.mxu0 0
  %822 = vmatprep.subr.bf16.mxu0 0
  %823 = vmatpush1.bf16.msra.mxu0 0
  %824 = vmatprep.subr.bf16.mxu0 0
  %825 = vmatpush1.bf16.msra.mxu0 0
  %826 = vmatprep.subr.bf16.mxu0 0
  %827 = vmatpush1.bf16.msra.mxu0 0
  %828 = vmatprep.subr.bf16.mxu0 0
  %829 = vmatpush1.bf16.msra.mxu0 0
  %830 = vmatprep.subr.bf16.mxu0 0
  %831 = vmatpush1.bf16.msra.mxu0 0
  %832 = vmatprep.subr.bf16.mxu0 0
  %833 = vmatpush1.bf16.msra.mxu0 0
  %834 = vmatprep.subr.bf16.mxu0 0
  %835 = vmatpush1.bf16.msra.mxu0 0
  %836 = vmatprep.mubr.bf16.mxu0 0
  %837 = vmatmul.mubr.bf16.gmra.mrb[0].mxu0 %v723
  %v838 = vpop.f32.mrb[0].mxu0
  %v839 = vadd.f32 %v755, %v838
  %v840 = vpop.f32.mrb[0].mxu0
  %v841 = vpop.f32.mrb[0].mxu0
  %v842 = vadd.f32 %v755, %v841
  %v843 = vpop.f32.mrb[0].mxu0
  %844 = vmatprep.mubr.bf16.mxu0 0
  %845 = vmatmul.mubr.bf16.gmra.mrb[0].mxu0 %v724
  %v846 = vpop.f32.mrb[0].mxu0
  %v847 = vadd.f32 %v755, %v846
  %v848 = vpop.f32.mrb[0].mxu0
  %v849 = vpop.f32.mrb[0].mxu0
  %v850 = vadd.f32 %v755, %v849
  %v851 = vpop.f32.mrb[0].mxu0
  %852 = vmatprep.mubr.bf16.mxu0 0
  %853 = vmatmul.mubr.bf16.gmra.mrb[0].mxu0 %v725
  %v854 = vpop.f32.mrb[0].mxu0
  %v855 = vadd.f32 %v755, %v854
  %v856 = vpop.f32.mrb[0].mxu0
  %v857 = vpop.f32.mrb[0].mxu0
  %v858 = vadd.f32 %v755, %v857
  %v859 = vpop.f32.mrb[0].mxu0
  %860 = vmatprep.mubr.bf16.mxu0 0
  %861 = vmatmul.mubr.bf16.gmra.mrb[0].mxu0 %v726
  %v862 = vpop.f32.mrb[0].mxu0
  %v863 = vadd.f32 %v755, %v862
  %v864 = vpop.f32.mrb[0].mxu0
  %v865 = vpop.f32.mrb[0].mxu0
  %v866 = vadd.f32 %v755, %v865
  %v867 = vpop.f32.mrb[0].mxu0
  %868 = vmatprep.mubr.bf16.mxu0 0
  %869 = vmatmul.mubr.bf16.gmra.mrb[0].mxu0 %v727
  %v870 = vpop.f32.mrb[0].mxu0
  %v871 = vadd.f32 %v755, %v870
  %v872 = vpop.f32.mrb[0].mxu0
  %v873 = vpop.f32.mrb[0].mxu0
  %v874 = vadd.f32 %v755, %v873
  %v875 = vpop.f32.mrb[0].mxu0
  %876 = vmatprep.mubr.bf16.mxu0 0
  %877 = vmatmul.mubr.bf16.gmra.mrb[0].mxu0 %v728
  %v878 = vpop.f32.mrb[0].mxu0
  %v879 = vadd.f32 %v755, %v878
  %v880 = vpop.f32.mrb[0].mxu0
  %v881 = vpop.f32.mrb[0].mxu0
  %v882 = vadd.f32 %v755, %v881
  %v883 = vpop.f32.mrb[0].mxu0
  %884 = vmatprep.mubr.bf16.mxu0 0
  %885 = vmatmul.mubr.bf16.gmra.mrb[0].mxu0 %v729
  %v886 = vpop.f32.mrb[0].mxu0
  %v887 = vadd.f32 %v755, %v886
  %v888 = vpop.f32.mrb[0].mxu0
  %v889 = vpop.f32.mrb[0].mxu0
  %v890 = vadd.f32 %v755, %v889
  %v891 = vpop.f32.mrb[0].mxu0
  %892 = vmatprep.mubr.bf16.mxu0 0
  %893 = vmatmul.mubr.bf16.gmra.mrb[0].mxu0 %v730
  %v894 = vpop.f32.mrb[0].mxu0
  %v895 = vadd.f32 %v755, %v894
  %v896 = vpop.f32.mrb[0].mxu0
  %v897 = vpop.f32.mrb[0].mxu0
  %v898 = vadd.f32 %v755, %v897
  %v899 = vpop.f32.mrb[0].mxu0
  %900 = vmatprep.mubr.bf16.mxu0 0
  %901 = vmatmul.mubr.bf16.gmra.mrb[0].mxu0 %v731
  %v902 = vpop.f32.mrb[0].mxu0
  %v903 = vadd.f32 %v755, %v902
  %v904 = vpop.f32.mrb[0].mxu0
  %v905 = vpop.f32.mrb[0].mxu0
  %v906 = vadd.f32 %v755, %v905
  %v907 = vpop.f32.mrb[0].mxu0
  %908 = vmatprep.mubr.bf16.mxu0 0
  %909 = vmatmul.mubr.bf16.gmra.mrb[0].mxu0 %v732
  %v910 = vpop.f32.mrb[0].mxu0
  %v911 = vadd.f32 %v755, %v910
  %v912 = vpop.f32.mrb[0].mxu0
  %v913 = vpop.f32.mrb[0].mxu0
  %v914 = vadd.f32 %v755, %v913
  %v915 = vpop.f32.mrb[0].mxu0
  %916 = vmatprep.mubr.bf16.mxu0 0
  %917 = vmatmul.mubr.bf16.gmra.mrb[0].mxu0 %v733
  %v918 = vpop.f32.mrb[0].mxu0
  %v919 = vadd.f32 %v755, %v918
  %v920 = vpop.f32.mrb[0].mxu0
  %v921 = vpop.f32.mrb[0].mxu0
  %v922 = vadd.f32 %v755, %v921
  %v923 = vpop.f32.mrb[0].mxu0
  %924 = vmatprep.mubr.bf16.mxu0 0
  %925 = vmatmul.mubr.bf16.gmra.mrb[0].mxu0 %v734
  %v926 = vpop.f32.mrb[0].mxu0
  %v927 = vadd.f32 %v755, %v926
  %v928 = vpop.f32.mrb[0].mxu0
  %v929 = vpop.f32.mrb[0].mxu0
  %v930 = vadd.f32 %v755, %v929
  %v931 = vpop.f32.mrb[0].mxu0
  %932 = vmatprep.mubr.bf16.mxu0 0
  %933 = vmatmul.mubr.bf16.gmra.mrb[0].mxu0 %v735
  %v934 = vpop.f32.mrb[0].mxu0
  %v935 = vadd.f32 %v755, %v934
  %v936 = vpop.f32.mrb[0].mxu0
  %v937 = vpop.f32.mrb[0].mxu0
  %v938 = vadd.f32 %v755, %v937
  %v939 = vpop.f32.mrb[0].mxu0
  %940 = vdwg.mxu0
  %v941 = vunpack.c.l.bf16 %v24
  %v942 = vunpack.c.l.bf16 %v25
  %v943 = vunpack.c.l.bf16 %v26
  %v944 = vunpack.c.l.bf16 %v27
  %v945 = vunpack.c.l.bf16 %v28
  %v946 = vunpack.c.l.bf16 %v29
  %v947 = vunpack.c.l.bf16 %v30
  %v948 = vunpack.c.l.bf16 %v31
  %v949 = vunpack.c.l.bf16 %v32
  %v950 = vunpack.c.l.bf16 %v33
  %v951 = vunpack.c.l.bf16 %v34
  %v952 = vunpack.c.l.bf16 %v35
  %v953 = vunpack.c.l.bf16 %v36
  %v954 = vunpack.c.l.bf16 %v37
  %v955 = vunpack.c.l.bf16 %v38
  %v956 = vunpack.c.l.bf16 %v39
  %v957 = vunpack.c.l.bf16 %v40
  %v958 = vunpack.c.l.bf16 %v41
  %v959 = vunpack.c.l.bf16 %v42
  %v960 = vunpack.c.l.bf16 %v43
  %v961 = vunpack.c.l.bf16 %v44
  %v962 = vunpack.c.l.bf16 %v45
  %v963 = vunpack.c.l.bf16 %v46
  %v964 = vunpack.c.l.bf16 %v47
  %v965 = vunpack.c.l.bf16 %v48
  %v966 = vunpack.c.l.bf16 %v49
  %v967 = vadd.f32 %v839, %v941
  %v968 = vadd.f32 %v842, %v942
  %v969 = vadd.f32 %v847, %v943
  %v970 = vadd.f32 %v850, %v944
  %v971 = vadd.f32 %v855, %v945
  %v972 = vadd.f32 %v858, %v946
  %v973 = vadd.f32 %v863, %v947
  %v974 = vadd.f32 %v866, %v948
  %v975 = vadd.f32 %v871, %v949
  %v976 = vadd.f32 %v874, %v950
  %v977 = vadd.f32 %v879, %v951
  %v978 = vadd.f32 %v882, %v952
  %v979 = vadd.f32 %v887, %v953
  %v980 = vadd.f32 %v890, %v954
  %v981 = vadd.f32 %v895, %v955
  %v982 = vadd.f32 %v898, %v956
  %v983 = vadd.f32 %v903, %v957
  %v984 = vadd.f32 %v906, %v958
  %v985 = vadd.f32 %v911, %v959
  %v986 = vadd.f32 %v914, %v960
  %v987 = vadd.f32 %v919, %v961
  %v988 = vadd.f32 %v922, %v962
  %v989 = vadd.f32 %v927, %v963
  %v990 = vadd.f32 %v930, %v964
  %v991 = vadd.f32 %v935, %v965
  %v992 = vadd.f32 %v938, %v966
  %vm993 = vcmp.ge.f32.partialorder %v967, 0.0
  %vm994 = vcmp.ge.f32.partialorder %v968, 0.0
  %vm995 = vcmp.ge.f32.partialorder %v969, 0.0
  %vm996 = vcmp.ge.f32.partialorder %v970, 0.0
  %vm997 = vcmp.ge.f32.partialorder %v971, 0.0
  %vm998 = vcmp.ge.f32.partialorder %v972, 0.0
  %vm999 = vcmp.ge.f32.partialorder %v973, 0.0
  %vm1000 = vcmp.ge.f32.partialorder %v974, 0.0
  %vm1001 = vcmp.ge.f32.partialorder %v975, 0.0
  %vm1002 = vcmp.ge.f32.partialorder %v976, 0.0
  %vm1003 = vcmp.ge.f32.partialorder %v977, 0.0
  %vm1004 = vcmp.ge.f32.partialorder %v978, 0.0
  %vm1005 = vcmp.ge.f32.partialorder %v979, 0.0
  %vm1006 = vcmp.ge.f32.partialorder %v980, 0.0
  %vm1007 = vcmp.ge.f32.partialorder %v981, 0.0
  %vm1008 = vcmp.ge.f32.partialorder %v982, 0.0
  %vm1009 = vcmp.ge.f32.partialorder %v983, 0.0
  %vm1010 = vcmp.ge.f32.partialorder %v984, 0.0
  %vm1011 = vcmp.ge.f32.partialorder %v985, 0.0
  %vm1012 = vcmp.ge.f32.partialorder %v986, 0.0
  %vm1013 = vcmp.ge.f32.partialorder %v987, 0.0
  %vm1014 = vcmp.ge.f32.partialorder %v988, 0.0
  %vm1015 = vcmp.ge.f32.partialorder %v989, 0.0
  %vm1016 = vcmp.ge.f32.partialorder %v990, 0.0
  %vm1017 = vcmp.ge.f32.partialorder %v991, 0.0
  %vm1018 = vcmp.ge.f32.partialorder %v992, 0.0
  %v1019 = vmul.f32 %v967, 0.01
  %v1020 = vmul.f32 %v968, 0.01
  %v1021 = vmul.f32 %v969, 0.01
  %v1022 = vmul.f32 %v970, 0.01
  %v1023 = vmul.f32 %v971, 0.01
  %v1024 = vmul.f32 %v972, 0.01
  %v1025 = vmul.f32 %v973, 0.01
  %v1026 = vmul.f32 %v974, 0.01
  %v1027 = vmul.f32 %v975, 0.01
  %v1028 = vmul.f32 %v976, 0.01
  %v1029 = vmul.f32 %v977, 0.01
  %v1030 = vmul.f32 %v978, 0.01
  %v1031 = vmul.f32 %v979, 0.01
  %v1032 = vmul.f32 %v980, 0.01
  %v1033 = vmul.f32 %v981, 0.01
  %v1034 = vmul.f32 %v982, 0.01
  %v1035 = vmul.f32 %v983, 0.01
  %v1036 = vmul.f32 %v984, 0.01
  %v1037 = vmul.f32 %v985, 0.01
  %v1038 = vmul.f32 %v986, 0.01
  %v1039 = vmul.f32 %v987, 0.01
  %v1040 = vmul.f32 %v988, 0.01
  %v1041 = vmul.f32 %v989, 0.01
  %v1042 = vmul.f32 %v990, 0.01
  %v1043 = vmul.f32 %v991, 0.01
  %v1044 = vmul.f32 %v992, 0.01
  %v1045 = vsel %vm993, %v967, %v1019
  %v1046 = vsel %vm994, %v968, %v1020
  %v1047 = vsel %vm995, %v969, %v1021
  %v1048 = vsel %vm996, %v970, %v1022
  %v1049 = vsel %vm997, %v971, %v1023
  %v1050 = vsel %vm998, %v972, %v1024
  %v1051 = vsel %vm999, %v973, %v1025
  %v1052 = vsel %vm1000, %v974, %v1026
  %v1053 = vsel %vm1001, %v975, %v1027
  %v1054 = vsel %vm1002, %v976, %v1028
  %v1055 = vsel %vm1003, %v977, %v1029
  %v1056 = vsel %vm1004, %v978, %v1030
  %v1057 = vsel %vm1005, %v979, %v1031
  %v1058 = vsel %vm1006, %v980, %v1032
  %v1059 = vsel %vm1007, %v981, %v1033
  %v1060 = vsel %vm1008, %v982, %v1034
  %v1061 = vsel %vm1009, %v983, %v1035
  %v1062 = vsel %vm1010, %v984, %v1036
  %v1063 = vsel %vm1011, %v985, %v1037
  %v1064 = vsel %vm1012, %v986, %v1038
  %v1065 = vsel %vm1013, %v987, %v1039
  %v1066 = vsel %vm1014, %v988, %v1040
  %v1067 = vsel %vm1015, %v989, %v1041
  %v1068 = vsel %vm1016, %v990, %v1042
  %v1069 = vsel %vm1017, %v991, %v1043
  %v1070 = vsel %vm1018, %v992, %v1044
  %v1071 = vpack.c.bf16 %v1046, %v1045
  %v1072 = vpack.c.bf16 %v1048, %v1047
  %v1073 = vpack.c.bf16 %v1050, %v1049
  %v1074 = vpack.c.bf16 %v1052, %v1051
  %v1075 = vpack.c.bf16 %v1054, %v1053
  %v1076 = vpack.c.bf16 %v1056, %v1055
  %v1077 = vpack.c.bf16 %v1058, %v1057
  %v1078 = vpack.c.bf16 %v1060, %v1059
  %v1079 = vpack.c.bf16 %v1062, %v1061
  %v1080 = vpack.c.bf16 %v1064, %v1063
  %v1081 = vpack.c.bf16 %v1066, %v1065
  %v1082 = vpack.c.bf16 %v1068, %v1067
  %v1083 = vpack.c.bf16 %v1070, %v1069
  %v1097 = vunpack.c.l.b16 %v1071
  %v1098 = vunpack.c.h.b16 %v1071
  %v1099 = vunpack.c.l.b16 %v1072
  %v1100 = vunpack.c.h.b16 %v1072
  %v1101 = vunpack.c.l.b16 %v1073
  %v1102 = vunpack.c.h.b16 %v1073
  %v1103 = vunpack.c.l.b16 %v1074
  %v1104 = vunpack.c.h.b16 %v1074
  %v1105 = vunpack.c.l.b16 %v1075
  %v1106 = vunpack.c.h.b16 %v1075
  %v1107 = vunpack.c.l.b16 %v1076
  %v1108 = vunpack.c.h.b16 %v1076
  %v1109 = vunpack.c.l.b16 %v1077
  %v1110 = vunpack.c.h.b16 %v1077
  %v1111 = vunpack.c.l.b16 %v1078
  %v1112 = vunpack.c.h.b16 %v1078
  %v1113 = vunpack.c.l.b16 %v1079
  %v1114 = vunpack.c.h.b16 %v1079
  %v1115 = vunpack.c.l.b16 %v1080
  %v1116 = vunpack.c.h.b16 %v1080
  %v1117 = vunpack.c.l.b16 %v1081
  %v1118 = vunpack.c.h.b16 %v1081
  %v1119 = vunpack.c.l.b16 %v1082
  %v1120 = vunpack.c.h.b16 %v1082
  %v1121 = vunpack.c.l.b16 %v1083
  %v1122 = vunpack.c.h.b16 %v1083
  %v1123 = vpack.c.b16 %v1097, %v1097
  %v1124 = vpack.c.b16 %v1098, %v1098
  %v1125 = vpack.c.b16 %v1099, %v1099
  %v1126 = vpack.c.b16 %v1100, %v1100
  %v1127 = vpack.c.b16 %v1101, %v1101
  %v1128 = vpack.c.b16 %v1102, %v1102
  %v1129 = vpack.c.b16 %v1103, %v1103
  %v1130 = vpack.c.b16 %v1104, %v1104
  %v1131 = vpack.c.b16 %v1105, %v1105
  %v1132 = vpack.c.b16 %v1106, %v1106
  %v1133 = vpack.c.b16 %v1107, %v1107
  %v1134 = vpack.c.b16 %v1108, %v1108
  %v1135 = vpack.c.b16 %v1109, %v1109
  %v1136 = vpack.c.b16 %v1110, %v1110
  %v1137 = vpack.c.b16 %v1111, %v1111
  %v1138 = vpack.c.b16 %v1112, %v1112
  %v1139 = vpack.c.b16 %v1113, %v1113
  %v1140 = vpack.c.b16 %v1114, %v1114
  %v1141 = vpack.c.b16 %v1115, %v1115
  %v1142 = vpack.c.b16 %v1116, %v1116
  %v1143 = vpack.c.b16 %v1117, %v1117
  %v1144 = vpack.c.b16 %v1118, %v1118
  %v1145 = vpack.c.b16 %v1119, %v1119
  %v1146 = vpack.c.b16 %v1120, %v1120
  %v1147 = vpack.c.b16 %v1121, %v1121
  %v1148 = vpack.c.b16 %v1122, %v1122
  %1175 = vst [vmem:[%s6] sm:$0xf] %v1123
  %1176 = vst [vmem:[%s6 + $0x4] sm:$0xf] %v1124
  %1177 = vst [vmem:[%s6 + $0x8] sm:$0xf] %v1125
  %1178 = vst [vmem:[%s6 + $0xc] sm:$0xf] %v1126
  %1179 = vst [vmem:[%s6 + $0x10] sm:$0xf] %v1127
  %1180 = vst [vmem:[%s6 + $0x14] sm:$0xf] %v1128
  %1181 = vst [vmem:[%s6 + $0x18] sm:$0xf] %v1129
  %1182 = vst [vmem:[%s6 + $0x1c] sm:$0xf] %v1130
  %1183 = vst [vmem:[%s6 + $0x20] sm:$0xf] %v1131
  %1184 = vst [vmem:[%s6 + $0x24] sm:$0xf] %v1132
  %1185 = vst [vmem:[%s6 + $0x28] sm:$0xf] %v1133
  %1186 = vst [vmem:[%s6 + $0x2c] sm:$0xf] %v1134
  %1187 = vst [vmem:[%s6 + $0x30] sm:$0xf] %v1135
  %1188 = vst [vmem:[%s6 + $0x34] sm:$0xf] %v1136
  %1189 = vst [vmem:[%s6 + $0x38] sm:$0xf] %v1137
  %1190 = vst [vmem:[%s6 + $0x3c] sm:$0xf] %v1138
  %1191 = vst [vmem:[%s6 + $0x40] sm:$0xf] %v1139
  %1192 = vst [vmem:[%s6 + $0x44] sm:$0xf] %v1140
  %1193 = vst [vmem:[%s6 + $0x48] sm:$0xf] %v1141
  %1194 = vst [vmem:[%s6 + $0x4c] sm:$0xf] %v1142
  %1195 = vst [vmem:[%s6 + $0x50] sm:$0xf] %v1143
  %1196 = vst [vmem:[%s6 + $0x54] sm:$0xf] %v1144
  %1197 = vst [vmem:[%s6 + $0x58] sm:$0xf] %v1145
  %1198 = vst [vmem:[%s6 + $0x5c] sm:$0xf] %v1146
  %1199 = vst [vmem:[%s6 + $0x60] sm:$0xf] %v1147
  %1200 = vst [vmem:[%s6 + $0x64] sm:$0xf] %v1148
  // Predicated region
  $region26: #{pmrb_forward.1} parent=0 // pred_check
    _
  $region27: #{pmrb_forward.1} parent=0 // pred_check_branch
    %1202 = sbr.rel (0) target = $region29
  $region28: #{pmrb_forward.1} parent=0 // pred_region
    _
  $region29: #{pmrb_forward.1} parent=0 // pred_fallthru
    _
  // Predicated region
  $region30: #{pmrb_forward.1} parent=0 // pred_check
    _
  $region31: #{pmrb_forward.1} parent=0 // pred_check_branch
    %1204 = sbr.rel (0) target = $region33
  $region32: #{pmrb_forward.1} parent=0 // pred_region
    _
  $region33: #{pmrb_forward.1} parent=0 // pred_fallthru
    _

// kernel: pmrb_forward.1
$region0: #{pmrb_forward.1}
  #allocation0 [shape = 'u32[]', space=smem, size = 0x4, offset = 0x4, fixed_abs, tag = 'smem constant byte address 0x4 - core index']
  #allocation1 [shape = 'u32[144,128]{1,0:T(1,128)}', space=vmem, size = 0x12000, scoped, tag = 'internal scratch']
  %s0 = inlined_call_operand.vmem [shape: bf16[208,128], index: 0, kind: input, shape index: {}]
  %s1 = inlined_call_operand.vmem [shape: bf16[208,32], index: 1, kind: input, shape index: {}]
  %s2 = inlined_call_operand.vmem [shape: bf16[128,128], index: 2, kind: input, shape index: {}]
  %s3 = inlined_call_operand.vmem [shape: bf16[32,128], index: 3, kind: input, shape index: {}]
  %s4 = inlined_call_operand.vmem [shape: bf16[128,128], index: 4, kind: input, shape index: {}]
  %s5 = inlined_call_operand.vmem [shape: f32[8,128], index: 5, kind: input, shape index: {}]
  %s6 = inlined_call_operand.vmem [shape: bf16[208,128], index: 6, kind: output, shape index: {}]
  %s7 = sld [smem:[#allocation0]]
  $region34: #{pmrb_forward.1} parent=0
    _
  %s9 = ssub.s32 1, %s7
  %s10 = scalar_select 0, %s9, %s7
  // Predicated region
  $region2: #{pmrb_forward.1} parent=0 // pred_check
    _
  $region3: #{pmrb_forward.1} parent=0 // pred_check_branch
    %12 = sbr.rel (0) target = $region5
  $region4: #{pmrb_forward.1} parent=0 // pred_region
    _
  $region5: #{pmrb_forward.1} parent=0 // pred_fallthru
    _
  // Predicated region
  $region6: #{pmrb_forward.1} parent=0 // pred_check
    _
  $region7: #{pmrb_forward.1} parent=0 // pred_check_branch
    %14 = sbr.rel (0) target = $region9
  $region8: #{pmrb_forward.1} parent=0 // pred_region
    _
  $region9: #{pmrb_forward.1} parent=0 // pred_fallthru
    _
  // Predicated region
  $region10: #{pmrb_forward.1} parent=0 // pred_check
    _
  $region11: #{pmrb_forward.1} parent=0 // pred_check_branch
    %16 = sbr.rel (0) target = $region13
  $region12: #{pmrb_forward.1} parent=0 // pred_region
    _
  $region13: #{pmrb_forward.1} parent=0 // pred_fallthru
    _
  // Predicated region
  $region14: #{pmrb_forward.1} parent=0 // pred_check
    _
  $region15: #{pmrb_forward.1} parent=0 // pred_check_branch
    %18 = sbr.rel (0) target = $region17
  $region16: #{pmrb_forward.1} parent=0 // pred_region
    _
  $region17: #{pmrb_forward.1} parent=0 // pred_fallthru
    _
  // Predicated region
  $region18: #{pmrb_forward.1} parent=0 // pred_check
    _
  $region19: #{pmrb_forward.1} parent=0 // pred_check_branch
    %20 = sbr.rel (0) target = $region21
  $region20: #{pmrb_forward.1} parent=0 // pred_region
    _
  $region21: #{pmrb_forward.1} parent=0 // pred_fallthru
    _
  // Predicated region
  $region22: #{pmrb_forward.1} parent=0 // pred_check
    _
  $region23: #{pmrb_forward.1} parent=0 // pred_check_branch
    %22 = sbr.rel (0) target = $region25
  $region24: #{pmrb_forward.1} parent=0 // pred_region
    _
  $region25: #{pmrb_forward.1} parent=0 // pred_fallthru
    _
  %v24 = vld [vmem:[%s0] sm:$0xf]
  %v25 = vld [vmem:[%s0 + $0x4] sm:$0xf]
  %v26 = vld [vmem:[%s0 + $0x8] sm:$0xf]
  %v27 = vld [vmem:[%s0 + $0xc] sm:$0xf]
  %v28 = vld [vmem:[%s0 + $0x10] sm:$0xf]
  %v29 = vld [vmem:[%s0 + $0x14] sm:$0xf]
  %v30 = vld [vmem:[%s0 + $0x18] sm:$0xf]
  %v31 = vld [vmem:[%s0 + $0x1c] sm:$0xf]
  %v32 = vld [vmem:[%s0 + $0x20] sm:$0xf]
  %v33 = vld [vmem:[%s0 + $0x24] sm:$0xf]
  %v34 = vld [vmem:[%s0 + $0x28] sm:$0xf]
  %v35 = vld [vmem:[%s0 + $0x2c] sm:$0xf]
  %v36 = vld [vmem:[%s0 + $0x30] sm:$0xf]
  %v37 = vld [vmem:[%s0 + $0x34] sm:$0xf]
  %v38 = vld [vmem:[%s0 + $0x38] sm:$0xf]
  %v39 = vld [vmem:[%s0 + $0x3c] sm:$0xf]
  %v40 = vld [vmem:[%s0 + $0x40] sm:$0xf]
  %v41 = vld [vmem:[%s0 + $0x44] sm:$0xf]
  %v42 = vld [vmem:[%s0 + $0x48] sm:$0xf]
  %v43 = vld [vmem:[%s0 + $0x4c] sm:$0xf]
  %v44 = vld [vmem:[%s0 + $0x50] sm:$0xf]
  %v45 = vld [vmem:[%s0 + $0x54] sm:$0xf]
  %v46 = vld [vmem:[%s0 + $0x58] sm:$0xf]
  %v47 = vld [vmem:[%s0 + $0x5c] sm:$0xf]
  %v48 = vld [vmem:[%s0 + $0x60] sm:$0xf]
  %v49 = vld [vmem:[%s0 + $0x64] sm:$0xf]
  %v50 = vld [vmem:[%s5] sm:$0x1]
  %v51 = vld [vmem:[%s5 + $0x1] sm:$0x1]
  %v52 = vld [vmem:[%s2] sm:$0xf]
  %v53 = vld [vmem:[%s2 + $0x4] sm:$0xf]
  %v54 = vld [vmem:[%s2 + $0x8] sm:$0xf]
  %v55 = vld [vmem:[%s2 + $0xc] sm:$0xf]
  %v56 = vld [vmem:[%s2 + $0x10] sm:$0xf]
  %v57 = vld [vmem:[%s2 + $0x14] sm:$0xf]
  %v58 = vld [vmem:[%s2 + $0x18] sm:$0xf]
  %v59 = vld [vmem:[%s2 + $0x1c] sm:$0xf]
  %v60 = vld [vmem:[%s2 + $0x20] sm:$0xf]
  %v61 = vld [vmem:[%s2 + $0x24] sm:$0xf]
  %v62 = vld [vmem:[%s2 + $0x28] sm:$0xf]
  %v63 = vld [vmem:[%s2 + $0x2c] sm:$0xf]
  %v64 = vld [vmem:[%s2 + $0x30] sm:$0xf]
  %v65 = vld [vmem:[%s2 + $0x34] sm:$0xf]
  %v66 = vld [vmem:[%s2 + $0x38] sm:$0xf]
  %v67 = vld [vmem:[%s2 + $0x3c] sm:$0xf]
  %v68 = vld [vmem:[%s1] sm:$0xf]
  %v69 = vld [vmem:[%s1 + $0x4] sm:$0xf]
  %v70 = vld [vmem:[%s1 + $0x8] sm:$0xf]
  %v71 = vld [vmem:[%s1 + $0xc] sm:$0xf]
  %v72 = vld [vmem:[%s1 + $0x10] sm:$0xf]
  %v73 = vld [vmem:[%s1 + $0x14] sm:$0xf]
  %v74 = vld [vmem:[%s1 + $0x18] sm:$0xf]
  %v75 = vld [vmem:[%s1 + $0x1c] sm:$0xf]
  %v76 = vld [vmem:[%s1 + $0x20] sm:$0xf]
  %v77 = vld [vmem:[%s1 + $0x24] sm:$0xf]
  %v78 = vld [vmem:[%s1 + $0x28] sm:$0xf]
  %v79 = vld [vmem:[%s1 + $0x2c] sm:$0xf]
  %v80 = vld [vmem:[%s1 + $0x30] sm:$0xf]
  %v81 = vld [vmem:[%s1 + $0x34] sm:$0xf]
  %v82 = vld [vmem:[%s1 + $0x38] sm:$0xf]
  %v83 = vld [vmem:[%s1 + $0x3c] sm:$0xf]
  %v84 = vld [vmem:[%s1 + $0x40] sm:$0xf]
  %v85 = vld [vmem:[%s1 + $0x44] sm:$0xf]
  %v86 = vld [vmem:[%s1 + $0x48] sm:$0xf]
  %v87 = vld [vmem:[%s1 + $0x4c] sm:$0xf]
  %v88 = vld [vmem:[%s1 + $0x50] sm:$0xf]
  %v89 = vld [vmem:[%s1 + $0x54] sm:$0xf]
  %v90 = vld [vmem:[%s1 + $0x58] sm:$0xf]
  %v91 = vld [vmem:[%s1 + $0x5c] sm:$0xf]
  %v92 = vld [vmem:[%s1 + $0x60] sm:$0xf]
  %v93 = vld [vmem:[%s1 + $0x64] sm:$0xf]
  %v94 = vld [vmem:[%s3] sm:$0xf]
  %v95 = vld [vmem:[%s3 + $0x4] sm:$0xf]
  %v96 = vld [vmem:[%s3 + $0x8] sm:$0xf]
  %v97 = vld [vmem:[%s3 + $0xc] sm:$0xf]
  %v124 = vunpack.c.l.b16 %v68
  %v125 = vunpack.c.l.b16 %v69
  %v126 = vunpack.c.l.b16 %v70
  %v127 = vunpack.c.l.b16 %v71
  %v128 = vunpack.c.l.b16 %v72
  %v129 = vunpack.c.l.b16 %v73
  %v130 = vunpack.c.l.b16 %v74
  %v131 = vunpack.c.l.b16 %v75
  %v132 = vunpack.c.l.b16 %v76
  %v133 = vunpack.c.l.b16 %v77
  %v134 = vunpack.c.l.b16 %v78
  %v135 = vunpack.c.l.b16 %v79
  %v136 = vunpack.c.l.b16 %v80
  %v137 = vunpack.c.l.b16 %v81
  %v138 = vunpack.c.l.b16 %v82
  %v139 = vunpack.c.l.b16 %v83
  %v140 = vunpack.c.l.b16 %v84
  %v141 = vunpack.c.l.b16 %v85
  %v142 = vunpack.c.l.b16 %v86
  %v143 = vunpack.c.l.b16 %v87
  %v144 = vunpack.c.l.b16 %v88
  %v145 = vunpack.c.l.b16 %v89
  %v146 = vunpack.c.l.b16 %v90
  %v147 = vunpack.c.l.b16 %v91
  %v148 = vunpack.c.l.b16 %v92
  %v149 = vunpack.c.l.b16 %v93
  %v150 = vpack.c.b16 %v125, %v124
  %v151 = vpack.c.b16 %v127, %v126
  %v152 = vpack.c.b16 %v129, %v128
  %v153 = vpack.c.b16 %v131, %v130
  %v154 = vpack.c.b16 %v133, %v132
  %v155 = vpack.c.b16 %v135, %v134
  %v156 = vpack.c.b16 %v137, %v136
  %v157 = vpack.c.b16 %v139, %v138
  %v158 = vpack.c.b16 %v141, %v140
  %v159 = vpack.c.b16 %v143, %v142
  %v160 = vpack.c.b16 %v145, %v144
  %v161 = vpack.c.b16 %v147, %v146
  %v162 = vpack.c.b16 %v149, %v148
  %v167 = vunpack.c.l.b16 %v94
  %v168 = vunpack.c.l.b16 %v95
  %v169 = vunpack.c.l.b16 %v96
  %v170 = vunpack.c.l.b16 %v97
  %v171 = vpack.c.b16 %v168, %v167
  %v172 = vpack.c.b16 %v170, %v169
  %vm175 = vcmask 261120
  %v177 = vsel %vm175, %v150, 0
  %v180 = vsel %vm175, %v151, 0
  %v183 = vsel %vm175, %v152, 0
  %v186 = vsel %vm175, %v153, 0
  %v189 = vsel %vm175, %v154, 0
  %v192 = vsel %vm175, %v155, 0
  %v195 = vsel %vm175, %v156, 0
  %v198 = vsel %vm175, %v157, 0
  %v201 = vsel %vm175, %v158, 0
  %v204 = vsel %vm175, %v159, 0
  %v207 = vsel %vm175, %v160, 0
  %v210 = vsel %vm175, %v161, 0
  %v213 = vsel %vm175, %v162, 0
  %215 = vmatprep.subr.bf16.mxu0 0
  %216 = vmatpush1.bf16.msra.mxu0 %v171
  %217 = vmatprep.subr.bf16.mxu0 0
  %218 = vmatpush1.bf16.msra.mxu0 %v172
  %219 = vmatprep.subr.bf16.mxu0 0
  %220 = vmatpush1.bf16.msra.mxu0 0
  %221 = vmatprep.subr.bf16.mxu0 0
  %222 = vmatpush1.bf16.msra.mxu0 0
  %223 = vmatprep.subr.bf16.mxu0 0
  %224 = vmatpush1.bf16.msra.mxu0 0
  %225 = vmatprep.subr.bf16.mxu0 0
  %226 = vmatpush1.bf16.msra.mxu0 0
  %227 = vmatprep.subr.bf16.mxu0 0
  %228 = vmatpush1.bf16.msra.mxu0 0
  %229 = vmatprep.subr.bf16.mxu0 0
  %230 = vmatpush1.bf16.msra.mxu0 0
  %231 = vmatprep.subr.bf16.mxu0 0
  %232 = vmatpush1.bf16.msra.mxu0 0
  %233 = vmatprep.subr.bf16.mxu0 0
  %234 = vmatpush1.bf16.msra.mxu0 0
  %235 = vmatprep.subr.bf16.mxu0 0
  %236 = vmatpush1.bf16.msra.mxu0 0
  %237 = vmatprep.subr.bf16.mxu0 0
  %238 = vmatpush1.bf16.msra.mxu0 0
  %239 = vmatprep.subr.bf16.mxu0 0
  %240 = vmatpush1.bf16.msra.mxu0 0
  %241 = vmatprep.subr.bf16.mxu0 0
  %242 = vmatpush1.bf16.msra.mxu0 0
  %243 = vmatprep.subr.bf16.mxu0 0
  %244 = vmatpush1.bf16.msra.mxu0 0
  %245 = vmatprep.subr.bf16.mxu0 0
  %246 = vmatpush1.bf16.msra.mxu0 0
  %247 = vmatprep.mubr.bf16.mxu0 0
  %248 = vmatmul.mubr.bf16.gmra.mrb[0].mxu0 %v177
  %v249 = vpop.f32.mrb[0].mxu0
  %v250 = vadd.f32 0.0, %v249
  %v251 = vpop.f32.mrb[0].mxu0
  %v252 = vpop.f32.mrb[0].mxu0
  %v253 = vadd.f32 0.0, %v252
  %v254 = vpop.f32.mrb[0].mxu0
  %255 = vmatprep.mubr.bf16.mxu0 0
  %256 = vmatmul.mubr.bf16.gmra.mrb[0].mxu0 %v180
  %v257 = vpop.f32.mrb[0].mxu0
  %v258 = vadd.f32 0.0, %v257
  %v259 = vpop.f32.mrb[0].mxu0
  %v260 = vpop.f32.mrb[0].mxu0
  %v261 = vadd.f32 0.0, %v260
  %v262 = vpop.f32.mrb[0].mxu0
  %263 = vmatprep.mubr.bf16.mxu0 0
  %264 = vmatmul.mubr.bf16.gmra.mrb[0].mxu0 %v183
  %v265 = vpop.f32.mrb[0].mxu0
  %v266 = vadd.f32 0.0, %v265
  %v267 = vpop.f32.mrb[0].mxu0
  %v268 = vpop.f32.mrb[0].mxu0
  %v269 = vadd.f32 0.0, %v268
  %v270 = vpop.f32.mrb[0].mxu0
  %271 = vmatprep.mubr.bf16.mxu0 0
  %272 = vmatmul.mubr.bf16.gmra.mrb[0].mxu0 %v186
  %v273 = vpop.f32.mrb[0].mxu0
  %v274 = vadd.f32 0.0, %v273
  %v275 = vpop.f32.mrb[0].mxu0
  %v276 = vpop.f32.mrb[0].mxu0
  %v277 = vadd.f32 0.0, %v276
  %v278 = vpop.f32.mrb[0].mxu0
  %279 = vmatprep.mubr.bf16.mxu0 0
  %280 = vmatmul.mubr.bf16.gmra.mrb[0].mxu0 %v189
  %v281 = vpop.f32.mrb[0].mxu0
  %v282 = vadd.f32 0.0, %v281
  %v283 = vpop.f32.mrb[0].mxu0
  %v284 = vpop.f32.mrb[0].mxu0
  %v285 = vadd.f32 0.0, %v284
  %v286 = vpop.f32.mrb[0].mxu0
  %287 = vmatprep.mubr.bf16.mxu0 0
  %288 = vmatmul.mubr.bf16.gmra.mrb[0].mxu0 %v192
  %v289 = vpop.f32.mrb[0].mxu0
  %v290 = vadd.f32 0.0, %v289
  %v291 = vpop.f32.mrb[0].mxu0
  %v292 = vpop.f32.mrb[0].mxu0
  %v293 = vadd.f32 0.0, %v292
  %v294 = vpop.f32.mrb[0].mxu0
  %295 = vmatprep.mubr.bf16.mxu0 0
  %296 = vmatmul.mubr.bf16.gmra.mrb[0].mxu0 %v195
  %v297 = vpop.f32.mrb[0].mxu0
  %v298 = vadd.f32 0.0, %v297
  %v299 = vpop.f32.mrb[0].mxu0
  %v300 = vpop.f32.mrb[0].mxu0
  %v301 = vadd.f32 0.0, %v300
  %v302 = vpop.f32.mrb[0].mxu0
  %303 = vmatprep.mubr.bf16.mxu0 0
  %304 = vmatmul.mubr.bf16.gmra.mrb[0].mxu0 %v198
  %v305 = vpop.f32.mrb[0].mxu0
  %v306 = vadd.f32 0.0, %v305
  %v307 = vpop.f32.mrb[0].mxu0
  %v308 = vpop.f32.mrb[0].mxu0
  %v309 = vadd.f32 0.0, %v308
  %v310 = vpop.f32.mrb[0].mxu0
  %311 = vmatprep.mubr.bf16.mxu0 0
  %312 = vmatmul.mubr.bf16.gmra.mrb[0].mxu0 %v201
  %v313 = vpop.f32.mrb[0].mxu0
  %v314 = vadd.f32 0.0, %v313
  %v315 = vpop.f32.mrb[0].mxu0
  %v316 = vpop.f32.mrb[0].mxu0
  %v317 = vadd.f32 0.0, %v316
  %v318 = vpop.f32.mrb[0].mxu0
  %319 = vmatprep.mubr.bf16.mxu0 0
  %320 = vmatmul.mubr.bf16.gmra.mrb[0].mxu0 %v204
  %v321 = vpop.f32.mrb[0].mxu0
  %v322 = vadd.f32 0.0, %v321
  %v323 = vpop.f32.mrb[0].mxu0
  %v324 = vpop.f32.mrb[0].mxu0
  %v325 = vadd.f32 0.0, %v324
  %v326 = vpop.f32.mrb[0].mxu0
  %327 = vmatprep.mubr.bf16.mxu0 0
  %328 = vmatmul.mubr.bf16.gmra.mrb[0].mxu0 %v207
  %v329 = vpop.f32.mrb[0].mxu0
  %v330 = vadd.f32 0.0, %v329
  %v331 = vpop.f32.mrb[0].mxu0
  %v332 = vpop.f32.mrb[0].mxu0
  %v333 = vadd.f32 0.0, %v332
  %v334 = vpop.f32.mrb[0].mxu0
  %335 = vmatprep.mubr.bf16.mxu0 0
  %336 = vmatmul.mubr.bf16.gmra.mrb[0].mxu0 %v210
  %v337 = vpop.f32.mrb[0].mxu0
  %v338 = vadd.f32 0.0, %v337
  %v339 = vpop.f32.mrb[0].mxu0
  %v340 = vpop.f32.mrb[0].mxu0
  %v341 = vadd.f32 0.0, %v340
  %v342 = vpop.f32.mrb[0].mxu0
  %343 = vmatprep.mubr.bf16.mxu0 0
  %344 = vmatmul.mubr.bf16.gmra.mrb[0].mxu0 %v213
  %v345 = vpop.f32.mrb[0].mxu0
  %v346 = vadd.f32 0.0, %v345
  %v347 = vpop.f32.mrb[0].mxu0
  %v348 = vpop.f32.mrb[0].mxu0
  %v349 = vadd.f32 0.0, %v348
  %v350 = vpop.f32.mrb[0].mxu0
  %351 = vdwg.mxu0
  %v378 = vunpack.c.l.b16 %v24
  %v379 = vunpack.c.l.b16 %v25
  %v380 = vunpack.c.l.b16 %v26
  %v381 = vunpack.c.l.b16 %v27
  %v382 = vunpack.c.l.b16 %v28
  %v383 = vunpack.c.l.b16 %v29
  %v384 = vunpack.c.l.b16 %v30
  %v385 = vunpack.c.l.b16 %v31
  %v386 = vunpack.c.l.b16 %v32
  %v387 = vunpack.c.l.b16 %v33
  %v388 = vunpack.c.l.b16 %v34
  %v389 = vunpack.c.l.b16 %v35
  %v390 = vunpack.c.l.b16 %v36
  %v391 = vunpack.c.l.b16 %v37
  %v392 = vunpack.c.l.b16 %v38
  %v393 = vunpack.c.l.b16 %v39
  %v394 = vunpack.c.l.b16 %v40
  %v395 = vunpack.c.l.b16 %v41
  %v396 = vunpack.c.l.b16 %v42
  %v397 = vunpack.c.l.b16 %v43
  %v398 = vunpack.c.l.b16 %v44
  %v399 = vunpack.c.l.b16 %v45
  %v400 = vunpack.c.l.b16 %v46
  %v401 = vunpack.c.l.b16 %v47
  %v402 = vunpack.c.l.b16 %v48
  %v403 = vunpack.c.l.b16 %v49
  %v404 = vpack.c.b16 %v379, %v378
  %v405 = vpack.c.b16 %v381, %v380
  %v406 = vpack.c.b16 %v383, %v382
  %v407 = vpack.c.b16 %v385, %v384
  %v408 = vpack.c.b16 %v387, %v386
  %v409 = vpack.c.b16 %v389, %v388
  %v410 = vpack.c.b16 %v391, %v390
  %v411 = vpack.c.b16 %v393, %v392
  %v412 = vpack.c.b16 %v395, %v394
  %v413 = vpack.c.b16 %v397, %v396
  %v414 = vpack.c.b16 %v399, %v398
  %v415 = vpack.c.b16 %v401, %v400
  %v416 = vpack.c.b16 %v403, %v402
  %v446 = vunpack.c.l.b16 %v52
  %v447 = vunpack.c.l.b16 %v53
  %v448 = vunpack.c.l.b16 %v54
  %v449 = vunpack.c.l.b16 %v55
  %v450 = vunpack.c.l.b16 %v56
  %v451 = vunpack.c.l.b16 %v57
  %v452 = vunpack.c.l.b16 %v58
  %v453 = vunpack.c.l.b16 %v59
  %v454 = vunpack.c.l.b16 %v60
  %v455 = vunpack.c.l.b16 %v61
  %v456 = vunpack.c.l.b16 %v62
  %v457 = vunpack.c.l.b16 %v63
  %v458 = vunpack.c.l.b16 %v64
  %v459 = vunpack.c.l.b16 %v65
  %v460 = vunpack.c.l.b16 %v66
  %v461 = vunpack.c.l.b16 %v67
  %v462 = vpack.c.b16 %v447, %v446
  %v463 = vpack.c.b16 %v449, %v448
  %v464 = vpack.c.b16 %v451, %v450
  %v465 = vpack.c.b16 %v453, %v452
  %v466 = vpack.c.b16 %v455, %v454
  %v467 = vpack.c.b16 %v457, %v456
  %v468 = vpack.c.b16 %v459, %v458
  %v469 = vpack.c.b16 %v461, %v460
  %478 = vmatprep.subr.bf16.mxu0 0
  %479 = vmatpush1.bf16.msra.mxu0 %v462
  %480 = vmatprep.subr.bf16.mxu0 0
  %481 = vmatpush1.bf16.msra.mxu0 %v463
  %482 = vmatprep.subr.bf16.mxu0 0
  %483 = vmatpush1.bf16.msra.mxu0 %v464
  %484 = vmatprep.subr.bf16.mxu0 0
  %485 = vmatpush1.bf16.msra.mxu0 %v465
  %486 = vmatprep.subr.bf16.mxu0 0
  %487 = vmatpush1.bf16.msra.mxu0 %v466
  %488 = vmatprep.subr.bf16.mxu0 0
  %489 = vmatpush1.bf16.msra.mxu0 %v467
  %490 = vmatprep.subr.bf16.mxu0 0
  %491 = vmatpush1.bf16.msra.mxu0 %v468
  %492 = vmatprep.subr.bf16.mxu0 0
  %493 = vmatpush1.bf16.msra.mxu0 %v469
  %494 = vmatprep.subr.bf16.mxu0 0
  %495 = vmatpush1.bf16.msra.mxu0 0
  %496 = vmatprep.subr.bf16.mxu0 0
  %497 = vmatpush1.bf16.msra.mxu0 0
  %498 = vmatprep.subr.bf16.mxu0 0
  %499 = vmatpush1.bf16.msra.mxu0 0
  %500 = vmatprep.subr.bf16.mxu0 0
  %501 = vmatpush1.bf16.msra.mxu0 0
  %502 = vmatprep.subr.bf16.mxu0 0
  %503 = vmatpush1.bf16.msra.mxu0 0
  %504 = vmatprep.subr.bf16.mxu0 0
  %505 = vmatpush1.bf16.msra.mxu0 0
  %506 = vmatprep.subr.bf16.mxu0 0
  %507 = vmatpush1.bf16.msra.mxu0 0
  %508 = vmatprep.subr.bf16.mxu0 0
  %509 = vmatpush1.bf16.msra.mxu0 0
  %510 = vmatprep.mubr.bf16.mxu0 0
  %511 = vmatmul.mubr.bf16.gmra.mrb[0].mxu0 %v404
  %v512 = vpop.f32.mrb[0].mxu0
  %v513 = vadd.f32 %v250, %v512
  %v514 = vpop.f32.mrb[0].mxu0
  %v515 = vpop.f32.mrb[0].mxu0
  %v516 = vadd.f32 %v253, %v515
  %v517 = vpop.f32.mrb[0].mxu0
  %518 = vmatprep.mubr.bf16.mxu0 0
  %519 = vmatmul.mubr.bf16.gmra.mrb[0].mxu0 %v405
  %v520 = vpop.f32.mrb[0].mxu0
  %v521 = vadd.f32 %v258, %v520
  %v522 = vpop.f32.mrb[0].mxu0
  %v523 = vpop.f32.mrb[0].mxu0
  %v524 = vadd.f32 %v261, %v523
  %v525 = vpop.f32.mrb[0].mxu0
  %526 = vmatprep.mubr.bf16.mxu0 0
  %527 = vmatmul.mubr.bf16.gmra.mrb[0].mxu0 %v406
  %v528 = vpop.f32.mrb[0].mxu0
  %v529 = vadd.f32 %v266, %v528
  %v530 = vpop.f32.mrb[0].mxu0
  %v531 = vpop.f32.mrb[0].mxu0
  %v532 = vadd.f32 %v269, %v531
  %v533 = vpop.f32.mrb[0].mxu0
  %534 = vmatprep.mubr.bf16.mxu0 0
  %535 = vmatmul.mubr.bf16.gmra.mrb[0].mxu0 %v407
  %v536 = vpop.f32.mrb[0].mxu0
  %v537 = vadd.f32 %v274, %v536
  %v538 = vpop.f32.mrb[0].mxu0
  %v539 = vpop.f32.mrb[0].mxu0
  %v540 = vadd.f32 %v277, %v539
  %v541 = vpop.f32.mrb[0].mxu0
  %542 = vmatprep.mubr.bf16.mxu0 0
  %543 = vmatmul.mubr.bf16.gmra.mrb[0].mxu0 %v408
  %v544 = vpop.f32.mrb[0].mxu0
  %v545 = vadd.f32 %v282, %v544
  %v546 = vpop.f32.mrb[0].mxu0
  %v547 = vpop.f32.mrb[0].mxu0
  %v548 = vadd.f32 %v285, %v547
  %v549 = vpop.f32.mrb[0].mxu0
  %550 = vmatprep.mubr.bf16.mxu0 0
  %551 = vmatmul.mubr.bf16.gmra.mrb[0].mxu0 %v409
  %v552 = vpop.f32.mrb[0].mxu0
  %v553 = vadd.f32 %v290, %v552
  %v554 = vpop.f32.mrb[0].mxu0
  %v555 = vpop.f32.mrb[0].mxu0
  %v556 = vadd.f32 %v293, %v555
  %v557 = vpop.f32.mrb[0].mxu0
  %558 = vmatprep.mubr.bf16.mxu0 0
  %559 = vmatmul.mubr.bf16.gmra.mrb[0].mxu0 %v410
  %v560 = vpop.f32.mrb[0].mxu0
  %v561 = vadd.f32 %v298, %v560
  %v562 = vpop.f32.mrb[0].mxu0
  %v563 = vpop.f32.mrb[0].mxu0
  %v564 = vadd.f32 %v301, %v563
  %v565 = vpop.f32.mrb[0].mxu0
  %566 = vmatprep.mubr.bf16.mxu0 0
  %567 = vmatmul.mubr.bf16.gmra.mrb[0].mxu0 %v411
  %v568 = vpop.f32.mrb[0].mxu0
  %v569 = vadd.f32 %v306, %v568
  %v570 = vpop.f32.mrb[0].mxu0
  %v571 = vpop.f32.mrb[0].mxu0
  %v572 = vadd.f32 %v309, %v571
  %v573 = vpop.f32.mrb[0].mxu0
  %574 = vmatprep.mubr.bf16.mxu0 0
  %575 = vmatmul.mubr.bf16.gmra.mrb[0].mxu0 %v412
  %v576 = vpop.f32.mrb[0].mxu0
  %v577 = vadd.f32 %v314, %v576
  %v578 = vpop.f32.mrb[0].mxu0
  %v579 = vpop.f32.mrb[0].mxu0
  %v580 = vadd.f32 %v317, %v579
  %v581 = vpop.f32.mrb[0].mxu0
  %582 = vmatprep.mubr.bf16.mxu0 0
  %583 = vmatmul.mubr.bf16.gmra.mrb[0].mxu0 %v413
  %v584 = vpop.f32.mrb[0].mxu0
  %v585 = vadd.f32 %v322, %v584
  %v586 = vpop.f32.mrb[0].mxu0
  %v587 = vpop.f32.mrb[0].mxu0
  %v588 = vadd.f32 %v325, %v587
  %v589 = vpop.f32.mrb[0].mxu0
  %590 = vmatprep.mubr.bf16.mxu0 0
  %591 = vmatmul.mubr.bf16.gmra.mrb[0].mxu0 %v414
  %v592 = vpop.f32.mrb[0].mxu0
  %v593 = vadd.f32 %v330, %v592
  %v594 = vpop.f32.mrb[0].mxu0
  %v595 = vpop.f32.mrb[0].mxu0
  %v596 = vadd.f32 %v333, %v595
  %v597 = vpop.f32.mrb[0].mxu0
  %598 = vmatprep.mubr.bf16.mxu0 0
  %599 = vmatmul.mubr.bf16.gmra.mrb[0].mxu0 %v415
  %v600 = vpop.f32.mrb[0].mxu0
  %v601 = vadd.f32 %v338, %v600
  %v602 = vpop.f32.mrb[0].mxu0
  %v603 = vpop.f32.mrb[0].mxu0
  %v604 = vadd.f32 %v341, %v603
  %v605 = vpop.f32.mrb[0].mxu0
  %606 = vmatprep.mubr.bf16.mxu0 0
  %607 = vmatmul.mubr.bf16.gmra.mrb[0].mxu0 %v416
  %v608 = vpop.f32.mrb[0].mxu0
  %v609 = vadd.f32 %v346, %v608
  %v610 = vpop.f32.mrb[0].mxu0
  %v611 = vpop.f32.mrb[0].mxu0
  %v612 = vadd.f32 %v349, %v611
  %v613 = vpop.f32.mrb[0].mxu0
  %614 = vdwg.mxu0
  %v615 = vlaneseq
  %v616 = vshrl.u32 %v615, 7
  %v617 = vsub.s32 0, %v616
  %v618 = vrot.slane %v50, %v617
  %v619 = vadd.f32 %v513, %v618
  %v620 = vadd.f32 %v516, %v618
  %v621 = vadd.f32 %v521, %v618
  %v622 = vadd.f32 %v524, %v618
  %v623 = vadd.f32 %v529, %v618
  %v624 = vadd.f32 %v532, %v618
  %v625 = vadd.f32 %v537, %v618
  %v626 = vadd.f32 %v540, %v618
  %v627 = vadd.f32 %v545, %v618
  %v628 = vadd.f32 %v548, %v618
  %v629 = vadd.f32 %v553, %v618
  %v630 = vadd.f32 %v556, %v618
  %v631 = vadd.f32 %v561, %v618
  %v632 = vadd.f32 %v564, %v618
  %v633 = vadd.f32 %v569, %v618
  %v634 = vadd.f32 %v572, %v618
  %v635 = vadd.f32 %v577, %v618
  %v636 = vadd.f32 %v580, %v618
  %v637 = vadd.f32 %v585, %v618
  %v638 = vadd.f32 %v588, %v618
  %v639 = vadd.f32 %v593, %v618
  %v640 = vadd.f32 %v596, %v618
  %v641 = vadd.f32 %v601, %v618
  %v642 = vadd.f32 %v604, %v618
  %v643 = vadd.f32 %v609, %v618
  %v644 = vadd.f32 %v612, %v618
  %vm645 = vcmp.ge.f32.partialorder %v619, 0.0
  %vm646 = vcmp.ge.f32.partialorder %v620, 0.0
  %vm647 = vcmp.ge.f32.partialorder %v621, 0.0
  %vm648 = vcmp.ge.f32.partialorder %v622, 0.0
  %vm649 = vcmp.ge.f32.partialorder %v623, 0.0
  %vm650 = vcmp.ge.f32.partialorder %v624, 0.0
  %vm651 = vcmp.ge.f32.partialorder %v625, 0.0
  %vm652 = vcmp.ge.f32.partialorder %v626, 0.0
  %vm653 = vcmp.ge.f32.partialorder %v627, 0.0
  %vm654 = vcmp.ge.f32.partialorder %v628, 0.0
  %vm655 = vcmp.ge.f32.partialorder %v629, 0.0
  %vm656 = vcmp.ge.f32.partialorder %v630, 0.0
  %vm657 = vcmp.ge.f32.partialorder %v631, 0.0
  %vm658 = vcmp.ge.f32.partialorder %v632, 0.0
  %vm659 = vcmp.ge.f32.partialorder %v633, 0.0
  %vm660 = vcmp.ge.f32.partialorder %v634, 0.0
  %vm661 = vcmp.ge.f32.partialorder %v635, 0.0
  %vm662 = vcmp.ge.f32.partialorder %v636, 0.0
  %vm663 = vcmp.ge.f32.partialorder %v637, 0.0
  %vm664 = vcmp.ge.f32.partialorder %v638, 0.0
  %vm665 = vcmp.ge.f32.partialorder %v639, 0.0
  %vm666 = vcmp.ge.f32.partialorder %v640, 0.0
  %vm667 = vcmp.ge.f32.partialorder %v641, 0.0
  %vm668 = vcmp.ge.f32.partialorder %v642, 0.0
  %vm669 = vcmp.ge.f32.partialorder %v643, 0.0
  %vm670 = vcmp.ge.f32.partialorder %v644, 0.0
  %v671 = vmul.f32 %v619, 0.01
  %v672 = vmul.f32 %v620, 0.01
  %v673 = vmul.f32 %v621, 0.01
  %v674 = vmul.f32 %v622, 0.01
  %v675 = vmul.f32 %v623, 0.01
  %v676 = vmul.f32 %v624, 0.01
  %v677 = vmul.f32 %v625, 0.01
  %v678 = vmul.f32 %v626, 0.01
  %v679 = vmul.f32 %v627, 0.01
  %v680 = vmul.f32 %v628, 0.01
  %v681 = vmul.f32 %v629, 0.01
  %v682 = vmul.f32 %v630, 0.01
  %v683 = vmul.f32 %v631, 0.01
  %v684 = vmul.f32 %v632, 0.01
  %v685 = vmul.f32 %v633, 0.01
  %v686 = vmul.f32 %v634, 0.01
  %v687 = vmul.f32 %v635, 0.01
  %v688 = vmul.f32 %v636, 0.01
  %v689 = vmul.f32 %v637, 0.01
  %v690 = vmul.f32 %v638, 0.01
  %v691 = vmul.f32 %v639, 0.01
  %v692 = vmul.f32 %v640, 0.01
  %v693 = vmul.f32 %v641, 0.01
  %v694 = vmul.f32 %v642, 0.01
  %v695 = vmul.f32 %v643, 0.01
  %v696 = vmul.f32 %v644, 0.01
  %v697 = vsel %vm645, %v619, %v671
  %v698 = vsel %vm646, %v620, %v672
  %v699 = vsel %vm647, %v621, %v673
  %v700 = vsel %vm648, %v622, %v674
  %v701 = vsel %vm649, %v623, %v675
  %v702 = vsel %vm650, %v624, %v676
  %v703 = vsel %vm651, %v625, %v677
  %v704 = vsel %vm652, %v626, %v678
  %v705 = vsel %vm653, %v627, %v679
  %v706 = vsel %vm654, %v628, %v680
  %v707 = vsel %vm655, %v629, %v681
  %v708 = vsel %vm656, %v630, %v682
  %v709 = vsel %vm657, %v631, %v683
  %v710 = vsel %vm658, %v632, %v684
  %v711 = vsel %vm659, %v633, %v685
  %v712 = vsel %vm660, %v634, %v686
  %v713 = vsel %vm661, %v635, %v687
  %v714 = vsel %vm662, %v636, %v688
  %v715 = vsel %vm663, %v637, %v689
  %v716 = vsel %vm664, %v638, %v690
  %v717 = vsel %vm665, %v639, %v691
  %v718 = vsel %vm666, %v640, %v692
  %v719 = vsel %vm667, %v641, %v693
  %v720 = vsel %vm668, %v642, %v694
  %v721 = vsel %vm669, %v643, %v695
  %v722 = vsel %vm670, %v644, %v696
  %v723 = vpack.c.bf16 %v698, %v697
  %v724 = vpack.c.bf16 %v700, %v699
  %v725 = vpack.c.bf16 %v702, %v701
  %v726 = vpack.c.bf16 %v704, %v703
  %v727 = vpack.c.bf16 %v706, %v705
  %v728 = vpack.c.bf16 %v708, %v707
  %v729 = vpack.c.bf16 %v710, %v709
  %v730 = vpack.c.bf16 %v712, %v711
  %v731 = vpack.c.bf16 %v714, %v713
  %v732 = vpack.c.bf16 %v716, %v715
  %v733 = vpack.c.bf16 %v718, %v717
  %v734 = vpack.c.bf16 %v720, %v719
  %v735 = vpack.c.bf16 %v722, %v721
  %v736 = vld [vmem:[%s4] sm:$0xf]
  %v737 = vld [vmem:[%s4 + $0x4] sm:$0xf]
  %v738 = vld [vmem:[%s4 + $0x8] sm:$0xf]
  %v739 = vld [vmem:[%s4 + $0xc] sm:$0xf]
  %v740 = vld [vmem:[%s4 + $0x10] sm:$0xf]
  %v741 = vld [vmem:[%s4 + $0x14] sm:$0xf]
  %v742 = vld [vmem:[%s4 + $0x18] sm:$0xf]
  %v743 = vld [vmem:[%s4 + $0x1c] sm:$0xf]
  %v744 = vld [vmem:[%s4 + $0x20] sm:$0xf]
  %v745 = vld [vmem:[%s4 + $0x24] sm:$0xf]
  %v746 = vld [vmem:[%s4 + $0x28] sm:$0xf]
  %v747 = vld [vmem:[%s4 + $0x2c] sm:$0xf]
  %v748 = vld [vmem:[%s4 + $0x30] sm:$0xf]
  %v749 = vld [vmem:[%s4 + $0x34] sm:$0xf]
  %v750 = vld [vmem:[%s4 + $0x38] sm:$0xf]
  %v751 = vld [vmem:[%s4 + $0x3c] sm:$0xf]
  %v752 = vlaneseq
  %v753 = vshrl.u32 %v752, 7
  %v754 = vsub.s32 0, %v753
  %v755 = vrot.slane %v51, %v754
  %v772 = vunpack.c.l.b16 %v736
  %v773 = vunpack.c.l.b16 %v737
  %v774 = vunpack.c.l.b16 %v738
  %v775 = vunpack.c.l.b16 %v739
  %v776 = vunpack.c.l.b16 %v740
  %v777 = vunpack.c.l.b16 %v741
  %v778 = vunpack.c.l.b16 %v742
  %v779 = vunpack.c.l.b16 %v743
  %v780 = vunpack.c.l.b16 %v744
  %v781 = vunpack.c.l.b16 %v745
  %v782 = vunpack.c.l.b16 %v746
  %v783 = vunpack.c.l.b16 %v747
  %v784 = vunpack.c.l.b16 %v748
  %v785 = vunpack.c.l.b16 %v749
  %v786 = vunpack.c.l.b16 %v750
  %v787 = vunpack.c.l.b16 %v751
  %v788 = vpack.c.b16 %v773, %v772
  %v789 = vpack.c.b16 %v775, %v774
  %v790 = vpack.c.b16 %v777, %v776
  %v791 = vpack.c.b16 %v779, %v778
  %v792 = vpack.c.b16 %v781, %v780
  %v793 = vpack.c.b16 %v783, %v782
  %v794 = vpack.c.b16 %v785, %v784
  %v795 = vpack.c.b16 %v787, %v786
  %804 = vmatprep.subr.bf16.mxu0 0
  %805 = vmatpush1.bf16.msra.mxu0 %v788
  %806 = vmatprep.subr.bf16.mxu0 0
  %807 = vmatpush1.bf16.msra.mxu0 %v789
  %808 = vmatprep.subr.bf16.mxu0 0
  %809 = vmatpush1.bf16.msra.mxu0 %v790
  %810 = vmatprep.subr.bf16.mxu0 0
  %811 = vmatpush1.bf16.msra.mxu0 %v791
  %812 = vmatprep.subr.bf16.mxu0 0
  %813 = vmatpush1.bf16.msra.mxu0 %v792
  %814 = vmatprep.subr.bf16.mxu0 0
  %815 = vmatpush1.bf16.msra.mxu0 %v793
  %816 = vmatprep.subr.bf16.mxu0 0
  %817 = vmatpush1.bf16.msra.mxu0 %v794
  %818 = vmatprep.subr.bf16.mxu0 0
  %819 = vmatpush1.bf16.msra.mxu0 %v795
  %820 = vmatprep.subr.bf16.mxu0 0
  %821 = vmatpush1.bf16.msra.mxu0 0
  %822 = vmatprep.subr.bf16.mxu0 0
  %823 = vmatpush1.bf16.msra.mxu0 0
  %824 = vmatprep.subr.bf16.mxu0 0
  %825 = vmatpush1.bf16.msra.mxu0 0
  %826 = vmatprep.subr.bf16.mxu0 0
  %827 = vmatpush1.bf16.msra.mxu0 0
  %828 = vmatprep.subr.bf16.mxu0 0
  %829 = vmatpush1.bf16.msra.mxu0 0
  %830 = vmatprep.subr.bf16.mxu0 0
  %831 = vmatpush1.bf16.msra.mxu0 0
  %832 = vmatprep.subr.bf16.mxu0 0
  %833 = vmatpush1.bf16.msra.mxu0 0
  %834 = vmatprep.subr.bf16.mxu0 0
  %835 = vmatpush1.bf16.msra.mxu0 0
  %836 = vmatprep.mubr.bf16.mxu0 0
  %837 = vmatmul.mubr.bf16.gmra.mrb[0].mxu0 %v723
  %v838 = vpop.f32.mrb[0].mxu0
  %v839 = vadd.f32 %v755, %v838
  %v840 = vpop.f32.mrb[0].mxu0
  %v841 = vpop.f32.mrb[0].mxu0
  %v842 = vadd.f32 %v755, %v841
  %v843 = vpop.f32.mrb[0].mxu0
  %844 = vmatprep.mubr.bf16.mxu0 0
  %845 = vmatmul.mubr.bf16.gmra.mrb[0].mxu0 %v724
  %v846 = vpop.f32.mrb[0].mxu0
  %v847 = vadd.f32 %v755, %v846
  %v848 = vpop.f32.mrb[0].mxu0
  %v849 = vpop.f32.mrb[0].mxu0
  %v850 = vadd.f32 %v755, %v849
  %v851 = vpop.f32.mrb[0].mxu0
  %852 = vmatprep.mubr.bf16.mxu0 0
  %853 = vmatmul.mubr.bf16.gmra.mrb[0].mxu0 %v725
  %v854 = vpop.f32.mrb[0].mxu0
  %v855 = vadd.f32 %v755, %v854
  %v856 = vpop.f32.mrb[0].mxu0
  %v857 = vpop.f32.mrb[0].mxu0
  %v858 = vadd.f32 %v755, %v857
  %v859 = vpop.f32.mrb[0].mxu0
  %860 = vmatprep.mubr.bf16.mxu0 0
  %861 = vmatmul.mubr.bf16.gmra.mrb[0].mxu0 %v726
  %v862 = vpop.f32.mrb[0].mxu0
  %v863 = vadd.f32 %v755, %v862
  %v864 = vpop.f32.mrb[0].mxu0
  %v865 = vpop.f32.mrb[0].mxu0
  %v866 = vadd.f32 %v755, %v865
  %v867 = vpop.f32.mrb[0].mxu0
  %868 = vmatprep.mubr.bf16.mxu0 0
  %869 = vmatmul.mubr.bf16.gmra.mrb[0].mxu0 %v727
  %v870 = vpop.f32.mrb[0].mxu0
  %v871 = vadd.f32 %v755, %v870
  %v872 = vpop.f32.mrb[0].mxu0
  %v873 = vpop.f32.mrb[0].mxu0
  %v874 = vadd.f32 %v755, %v873
  %v875 = vpop.f32.mrb[0].mxu0
  %876 = vmatprep.mubr.bf16.mxu0 0
  %877 = vmatmul.mubr.bf16.gmra.mrb[0].mxu0 %v728
  %v878 = vpop.f32.mrb[0].mxu0
  %v879 = vadd.f32 %v755, %v878
  %v880 = vpop.f32.mrb[0].mxu0
  %v881 = vpop.f32.mrb[0].mxu0
  %v882 = vadd.f32 %v755, %v881
  %v883 = vpop.f32.mrb[0].mxu0
  %884 = vmatprep.mubr.bf16.mxu0 0
  %885 = vmatmul.mubr.bf16.gmra.mrb[0].mxu0 %v729
  %v886 = vpop.f32.mrb[0].mxu0
  %v887 = vadd.f32 %v755, %v886
  %v888 = vpop.f32.mrb[0].mxu0
  %v889 = vpop.f32.mrb[0].mxu0
  %v890 = vadd.f32 %v755, %v889
  %v891 = vpop.f32.mrb[0].mxu0
  %892 = vmatprep.mubr.bf16.mxu0 0
  %893 = vmatmul.mubr.bf16.gmra.mrb[0].mxu0 %v730
  %v894 = vpop.f32.mrb[0].mxu0
  %v895 = vadd.f32 %v755, %v894
  %v896 = vpop.f32.mrb[0].mxu0
  %v897 = vpop.f32.mrb[0].mxu0
  %v898 = vadd.f32 %v755, %v897
  %v899 = vpop.f32.mrb[0].mxu0
  %900 = vmatprep.mubr.bf16.mxu0 0
  %901 = vmatmul.mubr.bf16.gmra.mrb[0].mxu0 %v731
  %v902 = vpop.f32.mrb[0].mxu0
  %v903 = vadd.f32 %v755, %v902
  %v904 = vpop.f32.mrb[0].mxu0
  %v905 = vpop.f32.mrb[0].mxu0
  %v906 = vadd.f32 %v755, %v905
  %v907 = vpop.f32.mrb[0].mxu0
  %908 = vmatprep.mubr.bf16.mxu0 0
  %909 = vmatmul.mubr.bf16.gmra.mrb[0].mxu0 %v732
  %v910 = vpop.f32.mrb[0].mxu0
  %v911 = vadd.f32 %v755, %v910
  %v912 = vpop.f32.mrb[0].mxu0
  %v913 = vpop.f32.mrb[0].mxu0
  %v914 = vadd.f32 %v755, %v913
  %v915 = vpop.f32.mrb[0].mxu0
  %916 = vmatprep.mubr.bf16.mxu0 0
  %917 = vmatmul.mubr.bf16.gmra.mrb[0].mxu0 %v733
  %v918 = vpop.f32.mrb[0].mxu0
  %v919 = vadd.f32 %v755, %v918
  %v920 = vpop.f32.mrb[0].mxu0
  %v921 = vpop.f32.mrb[0].mxu0
  %v922 = vadd.f32 %v755, %v921
  %v923 = vpop.f32.mrb[0].mxu0
  %924 = vmatprep.mubr.bf16.mxu0 0
  %925 = vmatmul.mubr.bf16.gmra.mrb[0].mxu0 %v734
  %v926 = vpop.f32.mrb[0].mxu0
  %v927 = vadd.f32 %v755, %v926
  %v928 = vpop.f32.mrb[0].mxu0
  %v929 = vpop.f32.mrb[0].mxu0
  %v930 = vadd.f32 %v755, %v929
  %v931 = vpop.f32.mrb[0].mxu0
  %932 = vmatprep.mubr.bf16.mxu0 0
  %933 = vmatmul.mubr.bf16.gmra.mrb[0].mxu0 %v735
  %v934 = vpop.f32.mrb[0].mxu0
  %v935 = vadd.f32 %v755, %v934
  %v936 = vpop.f32.mrb[0].mxu0
  %v937 = vpop.f32.mrb[0].mxu0
  %v938 = vadd.f32 %v755, %v937
  %v939 = vpop.f32.mrb[0].mxu0
  %940 = vdwg.mxu0
  %v941 = vunpack.c.l.bf16 %v24
  %v942 = vunpack.c.l.bf16 %v25
  %v943 = vunpack.c.l.bf16 %v26
  %v944 = vunpack.c.l.bf16 %v27
  %v945 = vunpack.c.l.bf16 %v28
  %v946 = vunpack.c.l.bf16 %v29
  %v947 = vunpack.c.l.bf16 %v30
  %v948 = vunpack.c.l.bf16 %v31
  %v949 = vunpack.c.l.bf16 %v32
  %v950 = vunpack.c.l.bf16 %v33
  %v951 = vunpack.c.l.bf16 %v34
  %v952 = vunpack.c.l.bf16 %v35
  %v953 = vunpack.c.l.bf16 %v36
  %v954 = vunpack.c.l.bf16 %v37
  %v955 = vunpack.c.l.bf16 %v38
  %v956 = vunpack.c.l.bf16 %v39
  %v957 = vunpack.c.l.bf16 %v40
  %v958 = vunpack.c.l.bf16 %v41
  %v959 = vunpack.c.l.bf16 %v42
  %v960 = vunpack.c.l.bf16 %v43
  %v961 = vunpack.c.l.bf16 %v44
  %v962 = vunpack.c.l.bf16 %v45
  %v963 = vunpack.c.l.bf16 %v46
  %v964 = vunpack.c.l.bf16 %v47
  %v965 = vunpack.c.l.bf16 %v48
  %v966 = vunpack.c.l.bf16 %v49
  %v967 = vadd.f32 %v839, %v941
  %v968 = vadd.f32 %v842, %v942
  %v969 = vadd.f32 %v847, %v943
  %v970 = vadd.f32 %v850, %v944
  %v971 = vadd.f32 %v855, %v945
  %v972 = vadd.f32 %v858, %v946
  %v973 = vadd.f32 %v863, %v947
  %v974 = vadd.f32 %v866, %v948
  %v975 = vadd.f32 %v871, %v949
  %v976 = vadd.f32 %v874, %v950
  %v977 = vadd.f32 %v879, %v951
  %v978 = vadd.f32 %v882, %v952
  %v979 = vadd.f32 %v887, %v953
  %v980 = vadd.f32 %v890, %v954
  %v981 = vadd.f32 %v895, %v955
  %v982 = vadd.f32 %v898, %v956
  %v983 = vadd.f32 %v903, %v957
  %v984 = vadd.f32 %v906, %v958
  %v985 = vadd.f32 %v911, %v959
  %v986 = vadd.f32 %v914, %v960
  %v987 = vadd.f32 %v919, %v961
  %v988 = vadd.f32 %v922, %v962
  %v989 = vadd.f32 %v927, %v963
  %v990 = vadd.f32 %v930, %v964
  %v991 = vadd.f32 %v935, %v965
  %v992 = vadd.f32 %v938, %v966
  %vm993 = vcmp.ge.f32.partialorder %v967, 0.0
  %vm994 = vcmp.ge.f32.partialorder %v968, 0.0
  %vm995 = vcmp.ge.f32.partialorder %v969, 0.0
  %vm996 = vcmp.ge.f32.partialorder %v970, 0.0
  %vm997 = vcmp.ge.f32.partialorder %v971, 0.0
  %vm998 = vcmp.ge.f32.partialorder %v972, 0.0
  %vm999 = vcmp.ge.f32.partialorder %v973, 0.0
  %vm1000 = vcmp.ge.f32.partialorder %v974, 0.0
  %vm1001 = vcmp.ge.f32.partialorder %v975, 0.0
  %vm1002 = vcmp.ge.f32.partialorder %v976, 0.0
  %vm1003 = vcmp.ge.f32.partialorder %v977, 0.0
  %vm1004 = vcmp.ge.f32.partialorder %v978, 0.0
  %vm1005 = vcmp.ge.f32.partialorder %v979, 0.0
  %vm1006 = vcmp.ge.f32.partialorder %v980, 0.0
  %vm1007 = vcmp.ge.f32.partialorder %v981, 0.0
  %vm1008 = vcmp.ge.f32.partialorder %v982, 0.0
  %vm1009 = vcmp.ge.f32.partialorder %v983, 0.0
  %vm1010 = vcmp.ge.f32.partialorder %v984, 0.0
  %vm1011 = vcmp.ge.f32.partialorder %v985, 0.0
  %vm1012 = vcmp.ge.f32.partialorder %v986, 0.0
  %vm1013 = vcmp.ge.f32.partialorder %v987, 0.0
  %vm1014 = vcmp.ge.f32.partialorder %v988, 0.0
  %vm1015 = vcmp.ge.f32.partialorder %v989, 0.0
  %vm1016 = vcmp.ge.f32.partialorder %v990, 0.0
  %vm1017 = vcmp.ge.f32.partialorder %v991, 0.0
  %vm1018 = vcmp.ge.f32.partialorder %v992, 0.0
  %v1019 = vmul.f32 %v967, 0.01
  %v1020 = vmul.f32 %v968, 0.01
  %v1021 = vmul.f32 %v969, 0.01
  %v1022 = vmul.f32 %v970, 0.01
  %v1023 = vmul.f32 %v971, 0.01
  %v1024 = vmul.f32 %v972, 0.01
  %v1025 = vmul.f32 %v973, 0.01
  %v1026 = vmul.f32 %v974, 0.01
  %v1027 = vmul.f32 %v975, 0.01
  %v1028 = vmul.f32 %v976, 0.01
  %v1029 = vmul.f32 %v977, 0.01
  %v1030 = vmul.f32 %v978, 0.01
  %v1031 = vmul.f32 %v979, 0.01
  %v1032 = vmul.f32 %v980, 0.01
  %v1033 = vmul.f32 %v981, 0.01
  %v1034 = vmul.f32 %v982, 0.01
  %v1035 = vmul.f32 %v983, 0.01
  %v1036 = vmul.f32 %v984, 0.01
  %v1037 = vmul.f32 %v985, 0.01
  %v1038 = vmul.f32 %v986, 0.01
  %v1039 = vmul.f32 %v987, 0.01
  %v1040 = vmul.f32 %v988, 0.01
  %v1041 = vmul.f32 %v989, 0.01
  %v1042 = vmul.f32 %v990, 0.01
  %v1043 = vmul.f32 %v991, 0.01
  %v1044 = vmul.f32 %v992, 0.01
  %v1045 = vsel %vm993, %v967, %v1019
  %v1046 = vsel %vm994, %v968, %v1020
  %v1047 = vsel %vm995, %v969, %v1021
  %v1048 = vsel %vm996, %v970, %v1022
  %v1049 = vsel %vm997, %v971, %v1023
  %v1050 = vsel %vm998, %v972, %v1024
  %v1051 = vsel %vm999, %v973, %v1025
  %v1052 = vsel %vm1000, %v974, %v1026
  %v1053 = vsel %vm1001, %v975, %v1027
  %v1054 = vsel %vm1002, %v976, %v1028
  %v1055 = vsel %vm1003, %v977, %v1029
  %v1056 = vsel %vm1004, %v978, %v1030
  %v1057 = vsel %vm1005, %v979, %v1031
  %v1058 = vsel %vm1006, %v980, %v1032
  %v1059 = vsel %vm1007, %v981, %v1033
  %v1060 = vsel %vm1008, %v982, %v1034
  %v1061 = vsel %vm1009, %v983, %v1035
  %v1062 = vsel %vm1010, %v984, %v1036
  %v1063 = vsel %vm1011, %v985, %v1037
  %v1064 = vsel %vm1012, %v986, %v1038
  %v1065 = vsel %vm1013, %v987, %v1039
  %v1066 = vsel %vm1014, %v988, %v1040
  %v1067 = vsel %vm1015, %v989, %v1041
  %v1068 = vsel %vm1016, %v990, %v1042
  %v1069 = vsel %vm1017, %v991, %v1043
  %v1070 = vsel %vm1018, %v992, %v1044
  %v1071 = vpack.c.bf16 %v1046, %v1045
  %v1072 = vpack.c.bf16 %v1048, %v1047
  %v1073 = vpack.c.bf16 %v1050, %v1049
  %v1074 = vpack.c.bf16 %v1052, %v1051
  %v1075 = vpack.c.bf16 %v1054, %v1053
  %v1076 = vpack.c.bf16 %v1056, %v1055
  %v1077 = vpack.c.bf16 %v1058, %v1057
  %v1078 = vpack.c.bf16 %v1060, %v1059
  %v1079 = vpack.c.bf16 %v1062, %v1061
  %v1080 = vpack.c.bf16 %v1064, %v1063
  %v1081 = vpack.c.bf16 %v1066, %v1065
  %v1082 = vpack.c.bf16 %v1068, %v1067
  %v1083 = vpack.c.bf16 %v1070, %v1069
  %v1097 = vunpack.c.l.b16 %v1071
  %v1098 = vunpack.c.h.b16 %v1071
  %v1099 = vunpack.c.l.b16 %v1072
  %v1100 = vunpack.c.h.b16 %v1072
  %v1101 = vunpack.c.l.b16 %v1073
  %v1102 = vunpack.c.h.b16 %v1073
  %v1103 = vunpack.c.l.b16 %v1074
  %v1104 = vunpack.c.h.b16 %v1074
  %v1105 = vunpack.c.l.b16 %v1075
  %v1106 = vunpack.c.h.b16 %v1075
  %v1107 = vunpack.c.l.b16 %v1076
  %v1108 = vunpack.c.h.b16 %v1076
  %v1109 = vunpack.c.l.b16 %v1077
  %v1110 = vunpack.c.h.b16 %v1077
  %v1111 = vunpack.c.l.b16 %v1078
  %v1112 = vunpack.c.h.b16 %v1078
  %v1113 = vunpack.c.l.b16 %v1079
  %v1114 = vunpack.c.h.b16 %v1079
  %v1115 = vunpack.c.l.b16 %v1080
  %v1116 = vunpack.c.h.b16 %v1080
  %v1117 = vunpack.c.l.b16 %v1081
  %v1118 = vunpack.c.h.b16 %v1081
  %v1119 = vunpack.c.l.b16 %v1082
  %v1120 = vunpack.c.h.b16 %v1082
  %v1121 = vunpack.c.l.b16 %v1083
  %v1122 = vunpack.c.h.b16 %v1083
  %v1123 = vpack.c.b16 %v1097, %v1097
  %v1124 = vpack.c.b16 %v1098, %v1098
  %v1125 = vpack.c.b16 %v1099, %v1099
  %v1126 = vpack.c.b16 %v1100, %v1100
  %v1127 = vpack.c.b16 %v1101, %v1101
  %v1128 = vpack.c.b16 %v1102, %v1102
  %v1129 = vpack.c.b16 %v1103, %v1103
  %v1130 = vpack.c.b16 %v1104, %v1104
  %v1131 = vpack.c.b16 %v1105, %v1105
  %v1132 = vpack.c.b16 %v1106, %v1106
  %v1133 = vpack.c.b16 %v1107, %v1107
  %v1134 = vpack.c.b16 %v1108, %v1108
  %v1135 = vpack.c.b16 %v1109, %v1109
  %v1136 = vpack.c.b16 %v1110, %v1110
  %v1137 = vpack.c.b16 %v1111, %v1111
  %v1138 = vpack.c.b16 %v1112, %v1112
  %v1139 = vpack.c.b16 %v1113, %v1113
  %v1140 = vpack.c.b16 %v1114, %v1114
  %v1141 = vpack.c.b16 %v1115, %v1115
  %v1142 = vpack.c.b16 %v1116, %v1116
  %v1143 = vpack.c.b16 %v1117, %v1117
  %v1144 = vpack.c.b16 %v1118, %v1118
  %v1145 = vpack.c.b16 %v1119, %v1119
  %v1146 = vpack.c.b16 %v1120, %v1120
  %v1147 = vpack.c.b16 %v1121, %v1121
  %v1148 = vpack.c.b16 %v1122, %v1122
  %1175 = vst [vmem:[%s6] sm:$0xf] %v1123
  %1176 = vst [vmem:[%s6 + $0x4] sm:$0xf] %v1124
  %1177 = vst [vmem:[%s6 + $0x8] sm:$0xf] %v1125
  %1178 = vst [vmem:[%s6 + $0xc] sm:$0xf] %v1126
  %1179 = vst [vmem:[%s6 + $0x10] sm:$0xf] %v1127
  %1180 = vst [vmem:[%s6 + $0x14] sm:$0xf] %v1128
  %1181 = vst [vmem:[%s6 + $0x18] sm:$0xf] %v1129
  %1182 = vst [vmem:[%s6 + $0x1c] sm:$0xf] %v1130
  %1183 = vst [vmem:[%s6 + $0x20] sm:$0xf] %v1131
  %1184 = vst [vmem:[%s6 + $0x24] sm:$0xf] %v1132
  %1185 = vst [vmem:[%s6 + $0x28] sm:$0xf] %v1133
  %1186 = vst [vmem:[%s6 + $0x2c] sm:$0xf] %v1134
  %1187 = vst [vmem:[%s6 + $0x30] sm:$0xf] %v1135
  %1188 = vst [vmem:[%s6 + $0x34] sm:$0xf] %v1136
  %1189 = vst [vmem:[%s6 + $0x38] sm:$0xf] %v1137
  %1190 = vst [vmem:[%s6 + $0x3c] sm:$0xf] %v1138
  %1191 = vst [vmem:[%s6 + $0x40] sm:$0xf] %v1139
  %1192 = vst [vmem:[%s6 + $0x44] sm:$0xf] %v1140
  %1193 = vst [vmem:[%s6 + $0x48] sm:$0xf] %v1141
  %1194 = vst [vmem:[%s6 + $0x4c] sm:$0xf] %v1142
  %1195 = vst [vmem:[%s6 + $0x50] sm:$0xf] %v1143
  %1196 = vst [vmem:[%s6 + $0x54] sm:$0xf] %v1144
  %1197 = vst [vmem:[%s6 + $0x58] sm:$0xf] %v1145
  %1198 = vst [vmem:[%s6 + $0x5c] sm:$0xf] %v1146
  %1199 = vst [vmem:[%s6 + $0x60] sm:$0xf] %v1147
  %1200 = vst [vmem:[%s6 + $0x64] sm:$0xf] %v1148
  // Predicated region
  $region26: #{pmrb_forward.1} parent=0 // pred_check
    _
  $region27: #{pmrb_forward.1} parent=0 // pred_check_branch
    %1202 = sbr.rel (0) target = $region29
  $region28: #{pmrb_forward.1} parent=0 // pred_region
    _
  $region29: #{pmrb_forward.1} parent=0 // pred_fallthru
    _
  // Predicated region
  $region30: #{pmrb_forward.1} parent=0 // pred_check
    _
  $region31: #{pmrb_forward.1} parent=0 // pred_check_branch
    %1204 = sbr.rel (0) target = $region33
  $region32: #{pmrb_forward.1} parent=0 // pred_region
    _
  $region33: #{pmrb_forward.1} parent=0 // pred_fallthru
    _

</llo_original>
